<compile_context>
chip_gen: v7x
topology: tpu7x:2x2x1
jax: 0.10.0
libtpu: 0.0.40
codegen_flags: <defaults>
</compile_context>

<pallas_src>
import jax
import jax.numpy as jnp
import numpy as np
from jax import lax
from jax.experimental import pallas as pl
from jax.experimental.pallas import tpu as pltpu


# ----------------------------------------------------------------------------
# Fused Pallas kernel: LSTM layer 1 + layer 2 (wavefront) -> Linear(H,1) -> sigmoid
# ----------------------------------------------------------------------------
def _make_sentiment_kernel(T, B, H):
    G = 4 * H
    f32 = jnp.float32
    bf16 = jnp.bfloat16

    def kernel(x_ref, wih1_ref, b1_ref, w1s_ref, whh2_ref, b2_ref,
               fcw_ref, fcb_ref, out_ref, xp1_scr):
        """All operands are whole-array VMEM refs (no grid).

        x_ref:    (T*B, F)  bf16  time-major input, pre-flattened in wrapper
        wih1_ref: (F, 4H)   bf16  layer-1 input weights
        b1_ref:   (1, 4H)   f32   layer-1 combined bias (b_ih + b_hh)
        w1s_ref:  (H, 8H)   bf16  [Whh1 | Wih2] stacked on N (one 256-wide push)
        whh2_ref: (H, 4H)   bf16  layer-2 recurrent weights
        b2_ref:   (1, 4H)   f32   layer-2 combined bias
        fcw_ref:  (1, H) f32   fcb_ref: (1, 1) f32   out_ref: (B, 1) f32
        xp1_scr:  (T*B, 4H) f32  layer-1 time-parallel input projection (VMEM)
        """

        def lstm_cell(gates, c):
            # torch.nn.LSTM gate order: i, f, g, o.  One sigmoid and one tanh
            # over the full (B, 4H) tile, then slice (fewer EUP passes than
            # 3 sigmoids + 1 tanh on quarter-filled vregs).
            sg = jax.nn.sigmoid(gates)
            th = jnp.tanh(gates)
            i = sg[:, 0 * H:1 * H]
            f = sg[:, 1 * H:2 * H]
            g = th[:, 2 * H:3 * H]
            o = sg[:, 3 * H:4 * H]
            c_new = f * c + i * g
            h_new = o * jnp.tanh(c_new)
            return h_new, c_new

        # ---- layer-1 time-parallel input projection: one MXU matmul for all T
        xp1_scr[...] = (jnp.dot(x_ref[...], wih1_ref[...],
                                preferred_element_type=f32) + b1_ref[...])

        zeros = jnp.zeros((B, H), f32)
        b2 = b2_ref[...]

        # Layer-1 step 0 (h1_{-1} = 0, so the gates are just the projection).
        h1, c1 = lstm_cell(xp1_scr[pl.ds(0, B), :], zeros)
        h2, c2 = zeros, zeros

        # ---- wavefront over the two recurrences --------------------------------
        # At step t we hold h1_t and h2_{t-1}.  rec1 (256-wide push) feeds both
        # layer-2 step t (cols [4H:8H] = h1_t @ Wih2) and layer-1 step t+1
        # (cols [:4H] = h1_t @ Whh1); rec2 is the independent h2-chain push.
        # T is small and static -> fully unrolled straight-line code.
        # TODO(synk): for long sequences switch to lax.fori_loop(..., unroll=k).
        for t in range(T):
            rec1 = jnp.dot(h1.astype(bf16), w1s_ref[...],
                           preferred_element_type=f32)           # (B, 8H)
            rec2 = jnp.dot(h2.astype(bf16), whh2_ref[...],
                           preferred_element_type=f32)           # (B, 4H)
            # layer-2 step t
            h2, c2 = lstm_cell(rec1[:, G:] + rec2 + b2, c2)
            # layer-1 step t+1 (the final layer-1 output is never consumed)
            if t + 1 < T:
                gates1 = xp1_scr[pl.ds((t + 1) * B, B), :] + rec1[:, :G]
                h1, c1 = lstm_cell(gates1, c1)

        # ---- FC(H -> 1) + sigmoid epilogue: VPU mul + lane reduce (no MXU) -----
        logits = (jnp.sum(h2 * fcw_ref[...], axis=-1, keepdims=True)
                  + fcb_ref[...])
        out_ref[...] = jax.nn.sigmoid(logits)

    return kernel


# ----------------------------------------------------------------------------
# Wrapper
# ----------------------------------------------------------------------------
@jax.jit
def sentiment_net_forward(params, X):
    """X: (B, T, nE) batch_first, matching the PyTorch module. Returns (B, 1)."""
    assert len(params["lstm"]) == 2, "fused kernel is specialized to nL=2"
    l1, l2 = params["lstm"]
    B, T, F = X.shape
    H = l1["whh_t"].shape[0]
    # Specialization contract (avoid masked partial tiles / heavy padding).
    assert (4 * H) % 128 == 0, "4*nH must be a multiple of 128"
    assert B % 8 == 0, "batch must be a multiple of 8"

    # Hoisted layout work (XLA side, not in-kernel): time-major, flattened,
    # bf16 MXU operand; layer-1 recurrent + layer-2 input weights stacked on N.
    x_flat = jnp.transpose(X, (1, 0, 2)).reshape(T * B, F).astype(jnp.bfloat16)
    w1s = jnp.concatenate([l1["whh_t"], l2["wih_t"]], axis=1)     # (H, 8H) bf16

    kernel = _make_sentiment_kernel(T, B, H)
    return pl.pallas_call(
        kernel,
        out_shape=jax.ShapeDtypeStruct((B, 1), jnp.float32),
        scratch_shapes=[
            pltpu.VMEM((T * B, 4 * H), jnp.float32),   # layer-1 input projection
        ],
    )(x_flat, l1["wih_t"], l1["bias"], w1s, l2["whh_t"], l2["bias"],
      params["fc_w"], params["fc_b"])


# ----------------------------------------------------------------------------
# Deterministic parameter init (PyTorch-style U(-1/sqrt(H), 1/sqrt(H)))
# ----------------------------------------------------------------------------
def init_params(key, nE, nH, nL):
    bound = 1.0 / np.sqrt(nH)
    layers = []
    for l in range(nL):
        f_in = nE if l == 0 else nH
        key, k1, k2, k3, k4 = jax.random.split(key, 5)
        wih = jax.random.uniform(k1, (4 * nH, f_in), jnp.float32, -bound, bound)
        whh = jax.random.uniform(k2, (4 * nH, nH), jnp.float32, -bound, bound)
        bih = jax.random.uniform(k3, (4 * nH,), jnp.float32, -bound, bound)
        bhh = jax.random.uniform(k4, (4 * nH,), jnp.float32, -bound, bound)
        layers.append({
            "wih_t": wih.T.astype(jnp.bfloat16),        # (f_in, 4H), MXU dtype
            "whh_t": whh.T.astype(jnp.bfloat16),        # (H, 4H)
            "bias": (bih + bhh).reshape(1, 4 * nH),     # (1, 4H) f32
        })
    key, k1, k2 = jax.random.split(key, 3)
    fc_w = jax.random.uniform(k1, (1, nH), jnp.float32, -bound, bound)
    fc_b = jax.random.uniform(k2, (1,), jnp.float32, -bound, bound)
    return {"lstm": layers, "fc_w": fc_w, "fc_b": fc_b.reshape(1, 1)}


# ----------------------------------------------------------------------------
# Pure-JAX reference (same mixed precision: bf16 matmul inputs, f32 accum/gates)
# ----------------------------------------------------------------------------
def reference_forward(params, X):
    bf16 = jnp.bfloat16
    x = jnp.transpose(X, (1, 0, 2)).astype(jnp.float32)   # (T, B, F)
    B = x.shape[1]
    for layer in params["lstm"]:
        wih, whh, b = layer["wih_t"], layer["whh_t"], layer["bias"]
        H = whh.shape[0]

        def step(carry, xt, wih=wih, whh=whh, b=b, H=H):
            h, c = carry
            gates = (jnp.dot(xt.astype(bf16), wih, preferred_element_type=jnp.float32)
                     + jnp.dot(h.astype(bf16), whh, preferred_element_type=jnp.float32)
                     + b)
            i = jax.nn.sigmoid(gates[:, 0 * H:1 * H])
            f = jax.nn.sigmoid(gates[:, 1 * H:2 * H])
            g = jnp.tanh(gates[:, 2 * H:3 * H])
            o = jax.nn.sigmoid(gates[:, 3 * H:4 * H])
            c_new = f * c + i * g
            h_new = o * jnp.tanh(c_new)
            return (h_new, c_new), h_new

        init = (jnp.zeros((B, H), jnp.float32), jnp.zeros((B, H), jnp.float32))
        _, x = lax.scan(step, init, x)
    h_last = x[-1]
    logits = jnp.sum(h_last * params["fc_w"], axis=-1, keepdims=True) + params["fc_b"]
    return jax.nn.sigmoid(logits)


# ----------------------------------------------------------------------------
if __name__ == "__main__":
    # Small shapes consistent with the module.  B=8 fills the f32 sublanes and
    # 4H=128 makes each gate tile exactly one lane-width.
    B, T, nE, nH, nL = 8, 8, 32, 32, 2

    key = jax.random.PRNGKey(0)
    key, pkey, xkey = jax.random.split(key, 3)
    params = init_params(pkey, nE, nH, nL)
    X = jax.random.normal(xkey, (B, T, nE), jnp.float32)

    out = jax.block_until_ready(sentiment_net_forward(params, X))
    assert out.shape == (B, 1)

    ref = jax.block_until_ready(reference_forward(params, X))
    np.testing.assert_allclose(np.asarray(out, dtype=np.float32),
                               np.asarray(ref, dtype=np.float32),
                               rtol=1e-3, atol=1e-3)

    print("KERNEL_OK")
</pallas_src>

<mosaic_0001>
module attributes {stable_mosaic.version = 11 : i64} {
  func.func @kernel(%arg0: memref<64x32xbf16, #tpu.memory_space<vmem>>, %arg1: memref<32x128xbf16, #tpu.memory_space<vmem>>, %arg2: memref<1x128xf32, #tpu.memory_space<vmem>>, %arg3: memref<32x256xbf16, #tpu.memory_space<vmem>>, %arg4: memref<32x128xbf16, #tpu.memory_space<vmem>>, %arg5: memref<1x128xf32, #tpu.memory_space<vmem>>, %arg6: memref<1x32xf32, #tpu.memory_space<vmem>>, %arg7: memref<1x1xf32, #tpu.memory_space<vmem>>, %arg8: memref<8x1xf32, #tpu.memory_space<vmem>>, %arg9: memref<64x128xf32, #tpu.memory_space<vmem>>) attributes {dimension_semantics = [], scalar_prefetch = 0 : i64, scratch_operands = 1 : i64, tpu.core_type = #tpu.core_type<tc>} {
    %c0 = arith.constant 0 : index
    %c0_0 = arith.constant 0 : index
    %0 = vector.load %arg0[%c0, %c0_0] : memref<64x32xbf16, #tpu.memory_space<vmem>>, vector<64x32xbf16>
    %c0_1 = arith.constant 0 : index
    %c0_2 = arith.constant 0 : index
    %1 = vector.load %arg1[%c0_1, %c0_2] : memref<32x128xbf16, #tpu.memory_space<vmem>>, vector<32x128xbf16>
    %cst = arith.constant dense<0.000000e+00> : vector<64x128xf32>
    %2 = tpu.matmul %0, %1, %cst {dimension_numbers = #tpu.dot_dimension_numbers<[1], [0], [0], [1], [0, 0, 1, 1], [], []>} : vector<64x32xbf16>, vector<32x128xbf16>, vector<64x128xf32> -> vector<64x128xf32>
    %c0_3 = arith.constant 0 : index
    %c0_4 = arith.constant 0 : index
    %3 = vector.load %arg2[%c0_3, %c0_4] : memref<1x128xf32, #tpu.memory_space<vmem>>, vector<1x128xf32>
    %4 = vector.broadcast %3 : vector<1x128xf32> to vector<64x128xf32>
    %5 = arith.addf %2, %4 : vector<64x128xf32>
    %c0_5 = arith.constant 0 : index
    %c0_6 = arith.constant 0 : index
    %6 = vector.load %arg9[%c0_5, %c0_6] : memref<64x128xf32, #tpu.memory_space<vmem>>, vector<64x128xf32>
    tpu.vector_store %arg9[%c0_5, %c0_6], %5 {strides = array<i32>} : memref<64x128xf32, #tpu.memory_space<vmem>>, vector<64x128xf32>,
    %cst_7 = arith.constant 0.000000e+00 : f32
    %7 = vector.broadcast %cst_7 : f32 to vector<8x32xf32>
    %c0_8 = arith.constant 0 : index
    %c0_9 = arith.constant 0 : index
    %8 = vector.load %arg5[%c0_8, %c0_9] : memref<1x128xf32, #tpu.memory_space<vmem>>, vector<1x128xf32>
    %c0_10 = arith.constant 0 : index
    %c0_11 = arith.constant 0 : index
    %9 = vector.load %arg9[%c0_10, %c0_11] : memref<64x128xf32, #tpu.memory_space<vmem>>, vector<8x128xf32>
    %10 = arith.negf %9 : vector<8x128xf32>
    %11 = math.exp %10 : vector<8x128xf32>
    %cst_12 = arith.constant 1.000000e+00 : f32
    %12 = vector.broadcast %cst_12 : f32 to vector<8x128xf32>
    %13 = arith.addf %12, %11 : vector<8x128xf32>
    %14 = arith.divf %12, %13 : vector<8x128xf32>
    %15 = math.tanh %9 : vector<8x128xf32>
    %16 = vector.extract_strided_slice %14 {offsets = [0, 0], sizes = [8, 32], strides = [1, 1]} : vector<8x128xf32> to vector<8x32xf32>
    %17 = vector.extract_strided_slice %14 {offsets = [0, 32], sizes = [8, 32], strides = [1, 1]} : vector<8x128xf32> to vector<8x32xf32>
    %18 = vector.extract_strided_slice %15 {offsets = [0, 64], sizes = [8, 32], strides = [1, 1]} : vector<8x128xf32> to vector<8x32xf32>
    %19 = vector.extract_strided_slice %14 {offsets = [0, 96], sizes = [8, 32], strides = [1, 1]} : vector<8x128xf32> to vector<8x32xf32>
    %20 = arith.mulf %17, %7 : vector<8x32xf32>
    %21 = arith.mulf %16, %18 : vector<8x32xf32>
    %22 = arith.addf %20, %21 : vector<8x32xf32>
    %23 = math.tanh %22 : vector<8x32xf32>
    %24 = arith.mulf %19, %23 : vector<8x32xf32>
    %25 = arith.truncf %24 : vector<8x32xf32> to vector<8x32xbf16>
    %c0_13 = arith.constant 0 : index
    %c0_14 = arith.constant 0 : index
    %26 = vector.load %arg3[%c0_13, %c0_14] : memref<32x256xbf16, #tpu.memory_space<vmem>>, vector<32x256xbf16>
    %cst_15 = arith.constant dense<0.000000e+00> : vector<8x256xf32>
    %27 = tpu.matmul %25, %26, %cst_15 {dimension_numbers = #tpu.dot_dimension_numbers<[1], [0], [0], [1], [0, 0, 1, 1], [], []>} : vector<8x32xbf16>, vector<32x256xbf16>, vector<8x256xf32> -> vector<8x256xf32>
    %28 = arith.truncf %7 : vector<8x32xf32> to vector<8x32xbf16>
    %c0_16 = arith.constant 0 : index
    %c0_17 = arith.constant 0 : index
    %29 = vector.load %arg4[%c0_16, %c0_17] : memref<32x128xbf16, #tpu.memory_space<vmem>>, vector<32x128xbf16>
    %cst_18 = arith.constant dense<0.000000e+00> : vector<8x128xf32>
    %30 = tpu.matmul %28, %29, %cst_18 {dimension_numbers = #tpu.dot_dimension_numbers<[1], [0], [0], [1], [0, 0, 1, 1], [], []>} : vector<8x32xbf16>, vector<32x128xbf16>, vector<8x128xf32> -> vector<8x128xf32>
    %31 = vector.extract_strided_slice %27 {offsets = [0, 128], sizes = [8, 128], strides = [1, 1]} : vector<8x256xf32> to vector<8x128xf32>
    %32 = arith.addf %31, %30 : vector<8x128xf32>
    %33 = vector.broadcast %8 : vector<1x128xf32> to vector<8x128xf32>
    %34 = arith.addf %32, %33 : vector<8x128xf32>
    %35 = arith.negf %34 : vector<8x128xf32>
    %36 = math.exp %35 : vector<8x128xf32>
    %cst_19 = arith.constant 1.000000e+00 : f32
    %37 = vector.broadcast %cst_19 : f32 to vector<8x128xf32>
    %38 = arith.addf %37, %36 : vector<8x128xf32>
    %39 = arith.divf %37, %38 : vector<8x128xf32>
    %40 = math.tanh %34 : vector<8x128xf32>
    %41 = vector.extract_strided_slice %39 {offsets = [0, 0], sizes = [8, 32], strides = [1, 1]} : vector<8x128xf32> to vector<8x32xf32>
    %42 = vector.extract_strided_slice %39 {offsets = [0, 32], sizes = [8, 32], strides = [1, 1]} : vector<8x128xf32> to vector<8x32xf32>
    %43 = vector.extract_strided_slice %40 {offsets = [0, 64], sizes = [8, 32], strides = [1, 1]} : vector<8x128xf32> to vector<8x32xf32>
    %44 = vector.extract_strided_slice %39 {offsets = [0, 96], sizes = [8, 32], strides = [1, 1]} : vector<8x128xf32> to vector<8x32xf32>
    %45 = arith.mulf %42, %7 : vector<8x32xf32>
    %46 = arith.mulf %41, %43 : vector<8x32xf32>
    %47 = arith.addf %45, %46 : vector<8x32xf32>
    %48 = math.tanh %47 : vector<8x32xf32>
    %49 = arith.mulf %44, %48 : vector<8x32xf32>
    %c8 = arith.constant 8 : index
    %c0_20 = arith.constant 0 : index
    %50 = vector.load %arg9[%c8, %c0_20] : memref<64x128xf32, #tpu.memory_space<vmem>>, vector<8x128xf32>
    %51 = vector.extract_strided_slice %27 {offsets = [0, 0], sizes = [8, 128], strides = [1, 1]} : vector<8x256xf32> to vector<8x128xf32>
    %52 = arith.addf %50, %51 : vector<8x128xf32>
    %53 = arith.negf %52 : vector<8x128xf32>
    %54 = math.exp %53 : vector<8x128xf32>
    %cst_21 = arith.constant 1.000000e+00 : f32
    %55 = vector.broadcast %cst_21 : f32 to vector<8x128xf32>
    %56 = arith.addf %55, %54 : vector<8x128xf32>
    %57 = arith.divf %55, %56 : vector<8x128xf32>
    %58 = math.tanh %52 : vector<8x128xf32>
    %59 = vector.extract_strided_slice %57 {offsets = [0, 0], sizes = [8, 32], strides = [1, 1]} : vector<8x128xf32> to vector<8x32xf32>
    %60 = vector.extract_strided_slice %57 {offsets = [0, 32], sizes = [8, 32], strides = [1, 1]} : vector<8x128xf32> to vector<8x32xf32>
    %61 = vector.extract_strided_slice %58 {offsets = [0, 64], sizes = [8, 32], strides = [1, 1]} : vector<8x128xf32> to vector<8x32xf32>
    %62 = vector.extract_strided_slice %57 {offsets = [0, 96], sizes = [8, 32], strides = [1, 1]} : vector<8x128xf32> to vector<8x32xf32>
    %63 = arith.mulf %60, %22 : vector<8x32xf32>
    %64 = arith.mulf %59, %61 : vector<8x32xf32>
    %65 = arith.addf %63, %64 : vector<8x32xf32>
    %66 = math.tanh %65 : vector<8x32xf32>
    %67 = arith.mulf %62, %66 : vector<8x32xf32>
    %68 = arith.truncf %67 : vector<8x32xf32> to vector<8x32xbf16>
    %c0_22 = arith.constant 0 : index
    %c0_23 = arith.constant 0 : index
    %69 = vector.load %arg3[%c0_22, %c0_23] : memref<32x256xbf16, #tpu.memory_space<vmem>>, vector<32x256xbf16>
    %cst_24 = arith.constant dense<0.000000e+00> : vector<8x256xf32>
    %70 = tpu.matmul %68, %69, %cst_24 {dimension_numbers = #tpu.dot_dimension_numbers<[1], [0], [0], [1], [0, 0, 1, 1], [], []>} : vector<8x32xbf16>, vector<32x256xbf16>, vector<8x256xf32> -> vector<8x256xf32>
    %71 = arith.truncf %49 : vector<8x32xf32> to vector<8x32xbf16>
    %c0_25 = arith.constant 0 : index
    %c0_26 = arith.constant 0 : index
    %72 = vector.load %arg4[%c0_25, %c0_26] : memref<32x128xbf16, #tpu.memory_space<vmem>>, vector<32x128xbf16>
    %cst_27 = arith.constant dense<0.000000e+00> : vector<8x128xf32>
    %73 = tpu.matmul %71, %72, %cst_27 {dimension_numbers = #tpu.dot_dimension_numbers<[1], [0], [0], [1], [0, 0, 1, 1], [], []>} : vector<8x32xbf16>, vector<32x128xbf16>, vector<8x128xf32> -> vector<8x128xf32>
    %74 = vector.extract_strided_slice %70 {offsets = [0, 128], sizes = [8, 128], strides = [1, 1]} : vector<8x256xf32> to vector<8x128xf32>
    %75 = arith.addf %74, %73 : vector<8x128xf32>
    %76 = vector.broadcast %8 : vector<1x128xf32> to vector<8x128xf32>
    %77 = arith.addf %75, %76 : vector<8x128xf32>
    %78 = arith.negf %77 : vector<8x128xf32>
    %79 = math.exp %78 : vector<8x128xf32>
    %cst_28 = arith.constant 1.000000e+00 : f32
    %80 = vector.broadcast %cst_28 : f32 to vector<8x128xf32>
    %81 = arith.addf %80, %79 : vector<8x128xf32>
    %82 = arith.divf %80, %81 : vector<8x128xf32>
    %83 = math.tanh %77 : vector<8x128xf32>
    %84 = vector.extract_strided_slice %82 {offsets = [0, 0], sizes = [8, 32], strides = [1, 1]} : vector<8x128xf32> to vector<8x32xf32>
    %85 = vector.extract_strided_slice %82 {offsets = [0, 32], sizes = [8, 32], strides = [1, 1]} : vector<8x128xf32> to vector<8x32xf32>
    %86 = vector.extract_strided_slice %83 {offsets = [0, 64], sizes = [8, 32], strides = [1, 1]} : vector<8x128xf32> to vector<8x32xf32>
    %87 = vector.extract_strided_slice %82 {offsets = [0, 96], sizes = [8, 32], strides = [1, 1]} : vector<8x128xf32> to vector<8x32xf32>
    %88 = arith.mulf %85, %47 : vector<8x32xf32>
    %89 = arith.mulf %84, %86 : vector<8x32xf32>
    %90 = arith.addf %88, %89 : vector<8x32xf32>
    %91 = math.tanh %90 : vector<8x32xf32>
    %92 = arith.mulf %87, %91 : vector<8x32xf32>
    %c16 = arith.constant 16 : index
    %c0_29 = arith.constant 0 : index
    %93 = vector.load %arg9[%c16, %c0_29] : memref<64x128xf32, #tpu.memory_space<vmem>>, vector<8x128xf32>
    %94 = vector.extract_strided_slice %70 {offsets = [0, 0], sizes = [8, 128], strides = [1, 1]} : vector<8x256xf32> to vector<8x128xf32>
    %95 = arith.addf %93, %94 : vector<8x128xf32>
    %96 = arith.negf %95 : vector<8x128xf32>
    %97 = math.exp %96 : vector<8x128xf32>
    %cst_30 = arith.constant 1.000000e+00 : f32
    %98 = vector.broadcast %cst_30 : f32 to vector<8x128xf32>
    %99 = arith.addf %98, %97 : vector<8x128xf32>
    %100 = arith.divf %98, %99 : vector<8x128xf32>
    %101 = math.tanh %95 : vector<8x128xf32>
    %102 = vector.extract_strided_slice %100 {offsets = [0, 0], sizes = [8, 32], strides = [1, 1]} : vector<8x128xf32> to vector<8x32xf32>
    %103 = vector.extract_strided_slice %100 {offsets = [0, 32], sizes = [8, 32], strides = [1, 1]} : vector<8x128xf32> to vector<8x32xf32>
    %104 = vector.extract_strided_slice %101 {offsets = [0, 64], sizes = [8, 32], strides = [1, 1]} : vector<8x128xf32> to vector<8x32xf32>
    %105 = vector.extract_strided_slice %100 {offsets = [0, 96], sizes = [8, 32], strides = [1, 1]} : vector<8x128xf32> to vector<8x32xf32>
    %106 = arith.mulf %103, %65 : vector<8x32xf32>
    %107 = arith.mulf %102, %104 : vector<8x32xf32>
    %108 = arith.addf %106, %107 : vector<8x32xf32>
    %109 = math.tanh %108 : vector<8x32xf32>
    %110 = arith.mulf %105, %109 : vector<8x32xf32>
    %111 = arith.truncf %110 : vector<8x32xf32> to vector<8x32xbf16>
    %c0_31 = arith.constant 0 : index
    %c0_32 = arith.constant 0 : index
    %112 = vector.load %arg3[%c0_31, %c0_32] : memref<32x256xbf16, #tpu.memory_space<vmem>>, vector<32x256xbf16>
    %cst_33 = arith.constant dense<0.000000e+00> : vector<8x256xf32>
    %113 = tpu.matmul %111, %112, %cst_33 {dimension_numbers = #tpu.dot_dimension_numbers<[1], [0], [0], [1], [0, 0, 1, 1], [], []>} : vector<8x32xbf16>, vector<32x256xbf16>, vector<8x256xf32> -> vector<8x256xf32>
    %114 = arith.truncf %92 : vector<8x32xf32> to vector<8x32xbf16>
    %c0_34 = arith.constant 0 : index
    %c0_35 = arith.constant 0 : index
    %115 = vector.load %arg4[%c0_34, %c0_35] : memref<32x128xbf16, #tpu.memory_space<vmem>>, vector<32x128xbf16>
    %cst_36 = arith.constant dense<0.000000e+00> : vector<8x128xf32>
    %116 = tpu.matmul %114, %115, %cst_36 {dimension_numbers = #tpu.dot_dimension_numbers<[1], [0], [0], [1], [0, 0, 1, 1], [], []>} : vector<8x32xbf16>, vector<32x128xbf16>, vector<8x128xf32> -> vector<8x128xf32>
    %117 = vector.extract_strided_slice %113 {offsets = [0, 128], sizes = [8, 128], strides = [1, 1]} : vector<8x256xf32> to vector<8x128xf32>
    %118 = arith.addf %117, %116 : vector<8x128xf32>
    %119 = vector.broadcast %8 : vector<1x128xf32> to vector<8x128xf32>
    %120 = arith.addf %118, %119 : vector<8x128xf32>
    %121 = arith.negf %120 : vector<8x128xf32>
    %122 = math.exp %121 : vector<8x128xf32>
    %cst_37 = arith.constant 1.000000e+00 : f32
    %123 = vector.broadcast %cst_37 : f32 to vector<8x128xf32>
    %124 = arith.addf %123, %122 : vector<8x128xf32>
    %125 = arith.divf %123, %124 : vector<8x128xf32>
    %126 = math.tanh %120 : vector<8x128xf32>
    %127 = vector.extract_strided_slice %125 {offsets = [0, 0], sizes = [8, 32], strides = [1, 1]} : vector<8x128xf32> to vector<8x32xf32>
    %128 = vector.extract_strided_slice %125 {offsets = [0, 32], sizes = [8, 32], strides = [1, 1]} : vector<8x128xf32> to vector<8x32xf32>
    %129 = vector.extract_strided_slice %126 {offsets = [0, 64], sizes = [8, 32], strides = [1, 1]} : vector<8x128xf32> to vector<8x32xf32>
    %130 = vector.extract_strided_slice %125 {offsets = [0, 96], sizes = [8, 32], strides = [1, 1]} : vector<8x128xf32> to vector<8x32xf32>
    %131 = arith.mulf %128, %90 : vector<8x32xf32>
    %132 = arith.mulf %127, %129 : vector<8x32xf32>
    %133 = arith.addf %131, %132 : vector<8x32xf32>
    %134 = math.tanh %133 : vector<8x32xf32>
    %135 = arith.mulf %130, %134 : vector<8x32xf32>
    %c24 = arith.constant 24 : index
    %c0_38 = arith.constant 0 : index
    %136 = vector.load %arg9[%c24, %c0_38] : memref<64x128xf32, #tpu.memory_space<vmem>>, vector<8x128xf32>
    %137 = vector.extract_strided_slice %113 {offsets = [0, 0], sizes = [8, 128], strides = [1, 1]} : vector<8x256xf32> to vector<8x128xf32>
    %138 = arith.addf %136, %137 : vector<8x128xf32>
    %139 = arith.negf %138 : vector<8x128xf32>
    %140 = math.exp %139 : vector<8x128xf32>
    %cst_39 = arith.constant 1.000000e+00 : f32
    %141 = vector.broadcast %cst_39 : f32 to vector<8x128xf32>
    %142 = arith.addf %141, %140 : vector<8x128xf32>
    %143 = arith.divf %141, %142 : vector<8x128xf32>
    %144 = math.tanh %138 : vector<8x128xf32>
    %145 = vector.extract_strided_slice %143 {offsets = [0, 0], sizes = [8, 32], strides = [1, 1]} : vector<8x128xf32> to vector<8x32xf32>
    %146 = vector.extract_strided_slice %143 {offsets = [0, 32], sizes = [8, 32], strides = [1, 1]} : vector<8x128xf32> to vector<8x32xf32>
    %147 = vector.extract_strided_slice %144 {offsets = [0, 64], sizes = [8, 32], strides = [1, 1]} : vector<8x128xf32> to vector<8x32xf32>
    %148 = vector.extract_strided_slice %143 {offsets = [0, 96], sizes = [8, 32], strides = [1, 1]} : vector<8x128xf32> to vector<8x32xf32>
    %149 = arith.mulf %146, %108 : vector<8x32xf32>
    %150 = arith.mulf %145, %147 : vector<8x32xf32>
    %151 = arith.addf %149, %150 : vector<8x32xf32>
    %152 = math.tanh %151 : vector<8x32xf32>
    %153 = arith.mulf %148, %152 : vector<8x32xf32>
    %154 = arith.truncf %153 : vector<8x32xf32> to vector<8x32xbf16>
    %c0_40 = arith.constant 0 : index
    %c0_41 = arith.constant 0 : index
    %155 = vector.load %arg3[%c0_40, %c0_41] : memref<32x256xbf16, #tpu.memory_space<vmem>>, vector<32x256xbf16>
    %cst_42 = arith.constant dense<0.000000e+00> : vector<8x256xf32>
    %156 = tpu.matmul %154, %155, %cst_42 {dimension_numbers = #tpu.dot_dimension_numbers<[1], [0], [0], [1], [0, 0, 1, 1], [], []>} : vector<8x32xbf16>, vector<32x256xbf16>, vector<8x256xf32> -> vector<8x256xf32>
    %157 = arith.truncf %135 : vector<8x32xf32> to vector<8x32xbf16>
    %c0_43 = arith.constant 0 : index
    %c0_44 = arith.constant 0 : index
    %158 = vector.load %arg4[%c0_43, %c0_44] : memref<32x128xbf16, #tpu.memory_space<vmem>>, vector<32x128xbf16>
    %cst_45 = arith.constant dense<0.000000e+00> : vector<8x128xf32>
    %159 = tpu.matmul %157, %158, %cst_45 {dimension_numbers = #tpu.dot_dimension_numbers<[1], [0], [0], [1], [0, 0, 1, 1], [], []>} : vector<8x32xbf16>, vector<32x128xbf16>, vector<8x128xf32> -> vector<8x128xf32>
    %160 = vector.extract_strided_slice %156 {offsets = [0, 128], sizes = [8, 128], strides = [1, 1]} : vector<8x256xf32> to vector<8x128xf32>
    %161 = arith.addf %160, %159 : vector<8x128xf32>
    %162 = vector.broadcast %8 : vector<1x128xf32> to vector<8x128xf32>
    %163 = arith.addf %161, %162 : vector<8x128xf32>
    %164 = arith.negf %163 : vector<8x128xf32>
    %165 = math.exp %164 : vector<8x128xf32>
    %cst_46 = arith.constant 1.000000e+00 : f32
    %166 = vector.broadcast %cst_46 : f32 to vector<8x128xf32>
    %167 = arith.addf %166, %165 : vector<8x128xf32>
    %168 = arith.divf %166, %167 : vector<8x128xf32>
    %169 = math.tanh %163 : vector<8x128xf32>
    %170 = vector.extract_strided_slice %168 {offsets = [0, 0], sizes = [8, 32], strides = [1, 1]} : vector<8x128xf32> to vector<8x32xf32>
    %171 = vector.extract_strided_slice %168 {offsets = [0, 32], sizes = [8, 32], strides = [1, 1]} : vector<8x128xf32> to vector<8x32xf32>
    %172 = vector.extract_strided_slice %169 {offsets = [0, 64], sizes = [8, 32], strides = [1, 1]} : vector<8x128xf32> to vector<8x32xf32>
    %173 = vector.extract_strided_slice %168 {offsets = [0, 96], sizes = [8, 32], strides = [1, 1]} : vector<8x128xf32> to vector<8x32xf32>
    %174 = arith.mulf %171, %133 : vector<8x32xf32>
    %175 = arith.mulf %170, %172 : vector<8x32xf32>
    %176 = arith.addf %174, %175 : vector<8x32xf32>
    %177 = math.tanh %176 : vector<8x32xf32>
    %178 = arith.mulf %173, %177 : vector<8x32xf32>
    %c32 = arith.constant 32 : index
    %c0_47 = arith.constant 0 : index
    %179 = vector.load %arg9[%c32, %c0_47] : memref<64x128xf32, #tpu.memory_space<vmem>>, vector<8x128xf32>
    %180 = vector.extract_strided_slice %156 {offsets = [0, 0], sizes = [8, 128], strides = [1, 1]} : vector<8x256xf32> to vector<8x128xf32>
    %181 = arith.addf %179, %180 : vector<8x128xf32>
    %182 = arith.negf %181 : vector<8x128xf32>
    %183 = math.exp %182 : vector<8x128xf32>
    %cst_48 = arith.constant 1.000000e+00 : f32
    %184 = vector.broadcast %cst_48 : f32 to vector<8x128xf32>
    %185 = arith.addf %184, %183 : vector<8x128xf32>
    %186 = arith.divf %184, %185 : vector<8x128xf32>
    %187 = math.tanh %181 : vector<8x128xf32>
    %188 = vector.extract_strided_slice %186 {offsets = [0, 0], sizes = [8, 32], strides = [1, 1]} : vector<8x128xf32> to vector<8x32xf32>
    %189 = vector.extract_strided_slice %186 {offsets = [0, 32], sizes = [8, 32], strides = [1, 1]} : vector<8x128xf32> to vector<8x32xf32>
    %190 = vector.extract_strided_slice %187 {offsets = [0, 64], sizes = [8, 32], strides = [1, 1]} : vector<8x128xf32> to vector<8x32xf32>
    %191 = vector.extract_strided_slice %186 {offsets = [0, 96], sizes = [8, 32], strides = [1, 1]} : vector<8x128xf32> to vector<8x32xf32>
    %192 = arith.mulf %189, %151 : vector<8x32xf32>
    %193 = arith.mulf %188, %190 : vector<8x32xf32>
    %194 = arith.addf %192, %193 : vector<8x32xf32>
    %195 = math.tanh %194 : vector<8x32xf32>
    %196 = arith.mulf %191, %195 : vector<8x32xf32>
    %197 = arith.truncf %196 : vector<8x32xf32> to vector<8x32xbf16>
    %c0_49 = arith.constant 0 : index
    %c0_50 = arith.constant 0 : index
    %198 = vector.load %arg3[%c0_49, %c0_50] : memref<32x256xbf16, #tpu.memory_space<vmem>>, vector<32x256xbf16>
    %cst_51 = arith.constant dense<0.000000e+00> : vector<8x256xf32>
    %199 = tpu.matmul %197, %198, %cst_51 {dimension_numbers = #tpu.dot_dimension_numbers<[1], [0], [0], [1], [0, 0, 1, 1], [], []>} : vector<8x32xbf16>, vector<32x256xbf16>, vector<8x256xf32> -> vector<8x256xf32>
    %200 = arith.truncf %178 : vector<8x32xf32> to vector<8x32xbf16>
    %c0_52 = arith.constant 0 : index
    %c0_53 = arith.constant 0 : index
    %201 = vector.load %arg4[%c0_52, %c0_53] : memref<32x128xbf16, #tpu.memory_space<vmem>>, vector<32x128xbf16>
    %cst_54 = arith.constant dense<0.000000e+00> : vector<8x128xf32>
    %202 = tpu.matmul %200, %201, %cst_54 {dimension_numbers = #tpu.dot_dimension_numbers<[1], [0], [0], [1], [0, 0, 1, 1], [], []>} : vector<8x32xbf16>, vector<32x128xbf16>, vector<8x128xf32> -> vector<8x128xf32>
    %203 = vector.extract_strided_slice %199 {offsets = [0, 128], sizes = [8, 128], strides = [1, 1]} : vector<8x256xf32> to vector<8x128xf32>
    %204 = arith.addf %203, %202 : vector<8x128xf32>
    %205 = vector.broadcast %8 : vector<1x128xf32> to vector<8x128xf32>
    %206 = arith.addf %204, %205 : vector<8x128xf32>
    %207 = arith.negf %206 : vector<8x128xf32>
    %208 = math.exp %207 : vector<8x128xf32>
    %cst_55 = arith.constant 1.000000e+00 : f32
    %209 = vector.broadcast %cst_55 : f32 to vector<8x128xf32>
    %210 = arith.addf %209, %208 : vector<8x128xf32>
    %211 = arith.divf %209, %210 : vector<8x128xf32>
    %212 = math.tanh %206 : vector<8x128xf32>
    %213 = vector.extract_strided_slice %211 {offsets = [0, 0], sizes = [8, 32], strides = [1, 1]} : vector<8x128xf32> to vector<8x32xf32>
    %214 = vector.extract_strided_slice %211 {offsets = [0, 32], sizes = [8, 32], strides = [1, 1]} : vector<8x128xf32> to vector<8x32xf32>
    %215 = vector.extract_strided_slice %212 {offsets = [0, 64], sizes = [8, 32], strides = [1, 1]} : vector<8x128xf32> to vector<8x32xf32>
    %216 = vector.extract_strided_slice %211 {offsets = [0, 96], sizes = [8, 32], strides = [1, 1]} : vector<8x128xf32> to vector<8x32xf32>
    %217 = arith.mulf %214, %176 : vector<8x32xf32>
    %218 = arith.mulf %213, %215 : vector<8x32xf32>
    %219 = arith.addf %217, %218 : vector<8x32xf32>
    %220 = math.tanh %219 : vector<8x32xf32>
    %221 = arith.mulf %216, %220 : vector<8x32xf32>
    %c40 = arith.constant 40 : index
    %c0_56 = arith.constant 0 : index
    %222 = vector.load %arg9[%c40, %c0_56] : memref<64x128xf32, #tpu.memory_space<vmem>>, vector<8x128xf32>
    %223 = vector.extract_strided_slice %199 {offsets = [0, 0], sizes = [8, 128], strides = [1, 1]} : vector<8x256xf32> to vector<8x128xf32>
    %224 = arith.addf %222, %223 : vector<8x128xf32>
    %225 = arith.negf %224 : vector<8x128xf32>
    %226 = math.exp %225 : vector<8x128xf32>
    %cst_57 = arith.constant 1.000000e+00 : f32
    %227 = vector.broadcast %cst_57 : f32 to vector<8x128xf32>
    %228 = arith.addf %227, %226 : vector<8x128xf32>
    %229 = arith.divf %227, %228 : vector<8x128xf32>
    %230 = math.tanh %224 : vector<8x128xf32>
    %231 = vector.extract_strided_slice %229 {offsets = [0, 0], sizes = [8, 32], strides = [1, 1]} : vector<8x128xf32> to vector<8x32xf32>
    %232 = vector.extract_strided_slice %229 {offsets = [0, 32], sizes = [8, 32], strides = [1, 1]} : vector<8x128xf32> to vector<8x32xf32>
    %233 = vector.extract_strided_slice %230 {offsets = [0, 64], sizes = [8, 32], strides = [1, 1]} : vector<8x128xf32> to vector<8x32xf32>
    %234 = vector.extract_strided_slice %229 {offsets = [0, 96], sizes = [8, 32], strides = [1, 1]} : vector<8x128xf32> to vector<8x32xf32>
    %235 = arith.mulf %232, %194 : vector<8x32xf32>
    %236 = arith.mulf %231, %233 : vector<8x32xf32>
    %237 = arith.addf %235, %236 : vector<8x32xf32>
    %238 = math.tanh %237 : vector<8x32xf32>
    %239 = arith.mulf %234, %238 : vector<8x32xf32>
    %240 = arith.truncf %239 : vector<8x32xf32> to vector<8x32xbf16>
    %c0_58 = arith.constant 0 : index
    %c0_59 = arith.constant 0 : index
    %241 = vector.load %arg3[%c0_58, %c0_59] : memref<32x256xbf16, #tpu.memory_space<vmem>>, vector<32x256xbf16>
    %cst_60 = arith.constant dense<0.000000e+00> : vector<8x256xf32>
    %242 = tpu.matmul %240, %241, %cst_60 {dimension_numbers = #tpu.dot_dimension_numbers<[1], [0], [0], [1], [0, 0, 1, 1], [], []>} : vector<8x32xbf16>, vector<32x256xbf16>, vector<8x256xf32> -> vector<8x256xf32>
    %243 = arith.truncf %221 : vector<8x32xf32> to vector<8x32xbf16>
    %c0_61 = arith.constant 0 : index
    %c0_62 = arith.constant 0 : index
    %244 = vector.load %arg4[%c0_61, %c0_62] : memref<32x128xbf16, #tpu.memory_space<vmem>>, vector<32x128xbf16>
    %cst_63 = arith.constant dense<0.000000e+00> : vector<8x128xf32>
    %245 = tpu.matmul %243, %244, %cst_63 {dimension_numbers = #tpu.dot_dimension_numbers<[1], [0], [0], [1], [0, 0, 1, 1], [], []>} : vector<8x32xbf16>, vector<32x128xbf16>, vector<8x128xf32> -> vector<8x128xf32>
    %246 = vector.extract_strided_slice %242 {offsets = [0, 128], sizes = [8, 128], strides = [1, 1]} : vector<8x256xf32> to vector<8x128xf32>
    %247 = arith.addf %246, %245 : vector<8x128xf32>
    %248 = vector.broadcast %8 : vector<1x128xf32> to vector<8x128xf32>
    %249 = arith.addf %247, %248 : vector<8x128xf32>
    %250 = arith.negf %249 : vector<8x128xf32>
    %251 = math.exp %250 : vector<8x128xf32>
    %cst_64 = arith.constant 1.000000e+00 : f32
    %252 = vector.broadcast %cst_64 : f32 to vector<8x128xf32>
    %253 = arith.addf %252, %251 : vector<8x128xf32>
    %254 = arith.divf %252, %253 : vector<8x128xf32>
    %255 = math.tanh %249 : vector<8x128xf32>
    %256 = vector.extract_strided_slice %254 {offsets = [0, 0], sizes = [8, 32], strides = [1, 1]} : vector<8x128xf32> to vector<8x32xf32>
    %257 = vector.extract_strided_slice %254 {offsets = [0, 32], sizes = [8, 32], strides = [1, 1]} : vector<8x128xf32> to vector<8x32xf32>
    %258 = vector.extract_strided_slice %255 {offsets = [0, 64], sizes = [8, 32], strides = [1, 1]} : vector<8x128xf32> to vector<8x32xf32>
    %259 = vector.extract_strided_slice %254 {offsets = [0, 96], sizes = [8, 32], strides = [1, 1]} : vector<8x128xf32> to vector<8x32xf32>
    %260 = arith.mulf %257, %219 : vector<8x32xf32>
    %261 = arith.mulf %256, %258 : vector<8x32xf32>
    %262 = arith.addf %260, %261 : vector<8x32xf32>
    %263 = math.tanh %262 : vector<8x32xf32>
    %264 = arith.mulf %259, %263 : vector<8x32xf32>
    %c48 = arith.constant 48 : index
    %c0_65 = arith.constant 0 : index
    %265 = vector.load %arg9[%c48, %c0_65] : memref<64x128xf32, #tpu.memory_space<vmem>>, vector<8x128xf32>
    %266 = vector.extract_strided_slice %242 {offsets = [0, 0], sizes = [8, 128], strides = [1, 1]} : vector<8x256xf32> to vector<8x128xf32>
    %267 = arith.addf %265, %266 : vector<8x128xf32>
    %268 = arith.negf %267 : vector<8x128xf32>
    %269 = math.exp %268 : vector<8x128xf32>
    %cst_66 = arith.constant 1.000000e+00 : f32
    %270 = vector.broadcast %cst_66 : f32 to vector<8x128xf32>
    %271 = arith.addf %270, %269 : vector<8x128xf32>
    %272 = arith.divf %270, %271 : vector<8x128xf32>
    %273 = math.tanh %267 : vector<8x128xf32>
    %274 = vector.extract_strided_slice %272 {offsets = [0, 0], sizes = [8, 32], strides = [1, 1]} : vector<8x128xf32> to vector<8x32xf32>
    %275 = vector.extract_strided_slice %272 {offsets = [0, 32], sizes = [8, 32], strides = [1, 1]} : vector<8x128xf32> to vector<8x32xf32>
    %276 = vector.extract_strided_slice %273 {offsets = [0, 64], sizes = [8, 32], strides = [1, 1]} : vector<8x128xf32> to vector<8x32xf32>
    %277 = vector.extract_strided_slice %272 {offsets = [0, 96], sizes = [8, 32], strides = [1, 1]} : vector<8x128xf32> to vector<8x32xf32>
    %278 = arith.mulf %275, %237 : vector<8x32xf32>
    %279 = arith.mulf %274, %276 : vector<8x32xf32>
    %280 = arith.addf %278, %279 : vector<8x32xf32>
    %281 = math.tanh %280 : vector<8x32xf32>
    %282 = arith.mulf %277, %281 : vector<8x32xf32>
    %283 = arith.truncf %282 : vector<8x32xf32> to vector<8x32xbf16>
    %c0_67 = arith.constant 0 : index
    %c0_68 = arith.constant 0 : index
    %284 = vector.load %arg3[%c0_67, %c0_68] : memref<32x256xbf16, #tpu.memory_space<vmem>>, vector<32x256xbf16>
    %cst_69 = arith.constant dense<0.000000e+00> : vector<8x256xf32>
    %285 = tpu.matmul %283, %284, %cst_69 {dimension_numbers = #tpu.dot_dimension_numbers<[1], [0], [0], [1], [0, 0, 1, 1], [], []>} : vector<8x32xbf16>, vector<32x256xbf16>, vector<8x256xf32> -> vector<8x256xf32>
    %286 = arith.truncf %264 : vector<8x32xf32> to vector<8x32xbf16>
    %c0_70 = arith.constant 0 : index
    %c0_71 = arith.constant 0 : index
    %287 = vector.load %arg4[%c0_70, %c0_71] : memref<32x128xbf16, #tpu.memory_space<vmem>>, vector<32x128xbf16>
    %cst_72 = arith.constant dense<0.000000e+00> : vector<8x128xf32>
    %288 = tpu.matmul %286, %287, %cst_72 {dimension_numbers = #tpu.dot_dimension_numbers<[1], [0], [0], [1], [0, 0, 1, 1], [], []>} : vector<8x32xbf16>, vector<32x128xbf16>, vector<8x128xf32> -> vector<8x128xf32>
    %289 = vector.extract_strided_slice %285 {offsets = [0, 128], sizes = [8, 128], strides = [1, 1]} : vector<8x256xf32> to vector<8x128xf32>
    %290 = arith.addf %289, %288 : vector<8x128xf32>
    %291 = vector.broadcast %8 : vector<1x128xf32> to vector<8x128xf32>
    %292 = arith.addf %290, %291 : vector<8x128xf32>
    %293 = arith.negf %292 : vector<8x128xf32>
    %294 = math.exp %293 : vector<8x128xf32>
    %cst_73 = arith.constant 1.000000e+00 : f32
    %295 = vector.broadcast %cst_73 : f32 to vector<8x128xf32>
    %296 = arith.addf %295, %294 : vector<8x128xf32>
    %297 = arith.divf %295, %296 : vector<8x128xf32>
    %298 = math.tanh %292 : vector<8x128xf32>
    %299 = vector.extract_strided_slice %297 {offsets = [0, 0], sizes = [8, 32], strides = [1, 1]} : vector<8x128xf32> to vector<8x32xf32>
    %300 = vector.extract_strided_slice %297 {offsets = [0, 32], sizes = [8, 32], strides = [1, 1]} : vector<8x128xf32> to vector<8x32xf32>
    %301 = vector.extract_strided_slice %298 {offsets = [0, 64], sizes = [8, 32], strides = [1, 1]} : vector<8x128xf32> to vector<8x32xf32>
    %302 = vector.extract_strided_slice %297 {offsets = [0, 96], sizes = [8, 32], strides = [1, 1]} : vector<8x128xf32> to vector<8x32xf32>
    %303 = arith.mulf %300, %262 : vector<8x32xf32>
    %304 = arith.mulf %299, %301 : vector<8x32xf32>
    %305 = arith.addf %303, %304 : vector<8x32xf32>
    %306 = math.tanh %305 : vector<8x32xf32>
    %307 = arith.mulf %302, %306 : vector<8x32xf32>
    %c56 = arith.constant 56 : index
    %c0_74 = arith.constant 0 : index
    %308 = vector.load %arg9[%c56, %c0_74] : memref<64x128xf32, #tpu.memory_space<vmem>>, vector<8x128xf32>
    %309 = vector.extract_strided_slice %285 {offsets = [0, 0], sizes = [8, 128], strides = [1, 1]} : vector<8x256xf32> to vector<8x128xf32>
    %310 = arith.addf %308, %309 : vector<8x128xf32>
    %311 = arith.negf %310 : vector<8x128xf32>
    %312 = math.exp %311 : vector<8x128xf32>
    %cst_75 = arith.constant 1.000000e+00 : f32
    %313 = vector.broadcast %cst_75 : f32 to vector<8x128xf32>
    %314 = arith.addf %313, %312 : vector<8x128xf32>
    %315 = arith.divf %313, %314 : vector<8x128xf32>
    %316 = math.tanh %310 : vector<8x128xf32>
    %317 = vector.extract_strided_slice %315 {offsets = [0, 0], sizes = [8, 32], strides = [1, 1]} : vector<8x128xf32> to vector<8x32xf32>
    %318 = vector.extract_strided_slice %315 {offsets = [0, 32], sizes = [8, 32], strides = [1, 1]} : vector<8x128xf32> to vector<8x32xf32>
    %319 = vector.extract_strided_slice %316 {offsets = [0, 64], sizes = [8, 32], strides = [1, 1]} : vector<8x128xf32> to vector<8x32xf32>
    %320 = vector.extract_strided_slice %315 {offsets = [0, 96], sizes = [8, 32], strides = [1, 1]} : vector<8x128xf32> to vector<8x32xf32>
    %321 = arith.mulf %318, %280 : vector<8x32xf32>
    %322 = arith.mulf %317, %319 : vector<8x32xf32>
    %323 = arith.addf %321, %322 : vector<8x32xf32>
    %324 = math.tanh %323 : vector<8x32xf32>
    %325 = arith.mulf %320, %324 : vector<8x32xf32>
    %326 = arith.truncf %325 : vector<8x32xf32> to vector<8x32xbf16>
    %c0_76 = arith.constant 0 : index
    %c0_77 = arith.constant 0 : index
    %327 = vector.load %arg3[%c0_76, %c0_77] : memref<32x256xbf16, #tpu.memory_space<vmem>>, vector<32x256xbf16>
    %cst_78 = arith.constant dense<0.000000e+00> : vector<8x256xf32>
    %328 = tpu.matmul %326, %327, %cst_78 {dimension_numbers = #tpu.dot_dimension_numbers<[1], [0], [0], [1], [0, 0, 1, 1], [], []>} : vector<8x32xbf16>, vector<32x256xbf16>, vector<8x256xf32> -> vector<8x256xf32>
    %329 = arith.truncf %307 : vector<8x32xf32> to vector<8x32xbf16>
    %c0_79 = arith.constant 0 : index
    %c0_80 = arith.constant 0 : index
    %330 = vector.load %arg4[%c0_79, %c0_80] : memref<32x128xbf16, #tpu.memory_space<vmem>>, vector<32x128xbf16>
    %cst_81 = arith.constant dense<0.000000e+00> : vector<8x128xf32>
    %331 = tpu.matmul %329, %330, %cst_81 {dimension_numbers = #tpu.dot_dimension_numbers<[1], [0], [0], [1], [0, 0, 1, 1], [], []>} : vector<8x32xbf16>, vector<32x128xbf16>, vector<8x128xf32> -> vector<8x128xf32>
    %332 = vector.extract_strided_slice %328 {offsets = [0, 128], sizes = [8, 128], strides = [1, 1]} : vector<8x256xf32> to vector<8x128xf32>
    %333 = arith.addf %332, %331 : vector<8x128xf32>
    %334 = vector.broadcast %8 : vector<1x128xf32> to vector<8x128xf32>
    %335 = arith.addf %333, %334 : vector<8x128xf32>
    %336 = arith.negf %335 : vector<8x128xf32>
    %337 = math.exp %336 : vector<8x128xf32>
    %cst_82 = arith.constant 1.000000e+00 : f32
    %338 = vector.broadcast %cst_82 : f32 to vector<8x128xf32>
    %339 = arith.addf %338, %337 : vector<8x128xf32>
    %340 = arith.divf %338, %339 : vector<8x128xf32>
    %341 = math.tanh %335 : vector<8x128xf32>
    %342 = vector.extract_strided_slice %340 {offsets = [0, 0], sizes = [8, 32], strides = [1, 1]} : vector<8x128xf32> to vector<8x32xf32>
    %343 = vector.extract_strided_slice %340 {offsets = [0, 32], sizes = [8, 32], strides = [1, 1]} : vector<8x128xf32> to vector<8x32xf32>
    %344 = vector.extract_strided_slice %341 {offsets = [0, 64], sizes = [8, 32], strides = [1, 1]} : vector<8x128xf32> to vector<8x32xf32>
    %345 = vector.extract_strided_slice %340 {offsets = [0, 96], sizes = [8, 32], strides = [1, 1]} : vector<8x128xf32> to vector<8x32xf32>
    %346 = arith.mulf %343, %305 : vector<8x32xf32>
    %347 = arith.mulf %342, %344 : vector<8x32xf32>
    %348 = arith.addf %346, %347 : vector<8x32xf32>
    %349 = math.tanh %348 : vector<8x32xf32>
    %350 = arith.mulf %345, %349 : vector<8x32xf32>
    %c0_83 = arith.constant 0 : index
    %c0_84 = arith.constant 0 : index
    %351 = vector.load %arg6[%c0_83, %c0_84] : memref<1x32xf32, #tpu.memory_space<vmem>>, vector<1x32xf32>
    %352 = vector.broadcast %351 : vector<1x32xf32> to vector<8x32xf32>
    %353 = arith.mulf %350, %352 : vector<8x32xf32>
    %cst_85 = arith.constant dense<0.000000e+00> : vector<8xf32>
    %354 = vector.multi_reduction <add>, %353, %cst_85 [1] : vector<8x32xf32> to vector<8xf32>
    %355 = vector.shape_cast %354 : vector<8xf32> to vector<8x1xf32>
    %c0_86 = arith.constant 0 : index
    %c0_87 = arith.constant 0 : index
    %356 = vector.load %arg7[%c0_86, %c0_87] : memref<1x1xf32, #tpu.memory_space<vmem>>, vector<1x1xf32>
    %357 = vector.broadcast %356 : vector<1x1xf32> to vector<8x1xf32>
    %358 = arith.addf %355, %357 : vector<8x1xf32>
    %359 = arith.negf %358 : vector<8x1xf32>
    %360 = math.exp %359 : vector<8x1xf32>
    %cst_88 = arith.constant 1.000000e+00 : f32
    %361 = vector.broadcast %cst_88 : f32 to vector<8x1xf32>
    %362 = arith.addf %361, %360 : vector<8x1xf32>
    %363 = arith.divf %361, %362 : vector<8x1xf32>
    %c0_89 = arith.constant 0 : index
    %c0_90 = arith.constant 0 : index
    %364 = vector.load %arg8[%c0_89, %c0_90] : memref<8x1xf32, #tpu.memory_space<vmem>>, vector<8x1xf32>
    tpu.vector_store %arg8[%c0_89, %c0_90], %363 {strides = array<i32>} : memref<8x1xf32, #tpu.memory_space<vmem>>, vector<8x1xf32>,
    return
  }
}

</mosaic_0001>

<llo_original>
// kernel: sentiment_net_forward.1
$region0: #{sentiment_net_forward.1}
  #allocation0 [shape = 'u32[]', space=smem, size = 0x4, offset = 0x4, fixed_abs, tag = 'smem constant byte address 0x4 - core index']
  #allocation1 [shape = 'u32[144,128]{1,0:T(1,128)}', space=vmem, size = 0x12000, scoped, tag = 'internal scratch']
  #allocation2 [shape = 'f32[64,128]{1,0:T(8,128)}', space=vmem, size = 0x8000, scoped, tag = 'scratch operand']
  #allocation3 [shape = 'f32[1,1]{1,0:T(1,128)S(1)}', space=vmem, size = 0x200, scoped, tag = 'scoped memory for sentiment_net_forward.1']
  %s0 = inlined_call_operand.vmem [shape: bf16[64,32], index: 0, kind: input, shape index: {}]
  %s1 = inlined_call_operand.vmem [shape: bf16[32,128], index: 1, kind: input, shape index: {}]
  %s2 = inlined_call_operand.vmem [shape: f32[1,128], index: 2, kind: input, shape index: {}]
  %s3 = inlined_call_operand.vmem [shape: bf16[32,256], index: 3, kind: input, shape index: {}]
  %s4 = inlined_call_operand.vmem [shape: bf16[32,128], index: 4, kind: input, shape index: {}]
  %s5 = inlined_call_operand.vmem [shape: f32[1,128], index: 5, kind: input, shape index: {}]
  %s6 = inlined_call_operand.vmem [shape: f32[1,32], index: 6, kind: input, shape index: {}]
  %s7 = inlined_call_operand.<no memory space> [shape: f32[1,1], index: 7, kind: input, shape index: {}]
  %s8 = inlined_call_operand.vmem [shape: f32[8,1], index: 8, kind: output, shape index: {}]
  %s9 = sld [smem:[#allocation0]]
  $region42: #{sentiment_net_forward.1} parent=0
    _
  %s11 = ssub.s32 1, %s9
  %s12 = scalar_select 0, %s11, %s9
  %v13 = vstv %s7
  %14 = vst [vmem:[#allocation3] sm:$0x1] %v13
  // Predicated region
  $region2: #{sentiment_net_forward.1} parent=0 // pred_check
    _
  $region3: #{sentiment_net_forward.1} parent=0 // pred_check_branch
    %16 = sbr.rel (0) target = $region5
  $region4: #{sentiment_net_forward.1} parent=0 // pred_region
    _
  $region5: #{sentiment_net_forward.1} parent=0 // pred_fallthru
    _
  // Predicated region
  $region6: #{sentiment_net_forward.1} parent=0 // pred_check
    _
  $region7: #{sentiment_net_forward.1} parent=0 // pred_check_branch
    %18 = sbr.rel (0) target = $region9
  $region8: #{sentiment_net_forward.1} parent=0 // pred_region
    _
  $region9: #{sentiment_net_forward.1} parent=0 // pred_fallthru
    _
  // Predicated region
  $region10: #{sentiment_net_forward.1} parent=0 // pred_check
    _
  $region11: #{sentiment_net_forward.1} parent=0 // pred_check_branch
    %20 = sbr.rel (0) target = $region13
  $region12: #{sentiment_net_forward.1} parent=0 // pred_region
    _
  $region13: #{sentiment_net_forward.1} parent=0 // pred_fallthru
    _
  // Predicated region
  $region14: #{sentiment_net_forward.1} parent=0 // pred_check
    _
  $region15: #{sentiment_net_forward.1} parent=0 // pred_check_branch
    %22 = sbr.rel (0) target = $region17
  $region16: #{sentiment_net_forward.1} parent=0 // pred_region
    _
  $region17: #{sentiment_net_forward.1} parent=0 // pred_fallthru
    _
  // Predicated region
  $region18: #{sentiment_net_forward.1} parent=0 // pred_check
    _
  $region19: #{sentiment_net_forward.1} parent=0 // pred_check_branch
    %24 = sbr.rel (0) target = $region21
  $region20: #{sentiment_net_forward.1} parent=0 // pred_region
    _
  $region21: #{sentiment_net_forward.1} parent=0 // pred_fallthru
    _
  // Predicated region
  $region22: #{sentiment_net_forward.1} parent=0 // pred_check
    _
  $region23: #{sentiment_net_forward.1} parent=0 // pred_check_branch
    %26 = sbr.rel (0) target = $region25
  $region24: #{sentiment_net_forward.1} parent=0 // pred_region
    _
  $region25: #{sentiment_net_forward.1} parent=0 // pred_fallthru
    _
  // Predicated region
  $region26: #{sentiment_net_forward.1} parent=0 // pred_check
    _
  $region27: #{sentiment_net_forward.1} parent=0 // pred_check_branch
    %28 = sbr.rel (0) target = $region29
  $region28: #{sentiment_net_forward.1} parent=0 // pred_region
    _
  $region29: #{sentiment_net_forward.1} parent=0 // pred_fallthru
    _
  // Predicated region
  $region30: #{sentiment_net_forward.1} parent=0 // pred_check
    _
  $region31: #{sentiment_net_forward.1} parent=0 // pred_check_branch
    %30 = sbr.rel (0) target = $region33
  $region32: #{sentiment_net_forward.1} parent=0 // pred_region
    _
  $region33: #{sentiment_net_forward.1} parent=0 // pred_fallthru
    _
  %v32 = vld [vmem:[%s0] sm:$0xf]
  %v33 = vld [vmem:[%s0 + $0x4] sm:$0xf]
  %v34 = vld [vmem:[%s0 + $0x8] sm:$0xf]
  %v35 = vld [vmem:[%s0 + $0xc] sm:$0xf]
  %v36 = vld [vmem:[%s0 + $0x10] sm:$0xf]
  %v37 = vld [vmem:[%s0 + $0x14] sm:$0xf]
  %v38 = vld [vmem:[%s0 + $0x18] sm:$0xf]
  %v39 = vld [vmem:[%s0 + $0x1c] sm:$0xf]
  %v40 = vld [vmem:[%s1] sm:$0xf]
  %v41 = vld [vmem:[%s1 + $0x4] sm:$0xf]
  %v42 = vld [vmem:[%s1 + $0x8] sm:$0xf]
  %v43 = vld [vmem:[%s1 + $0xc] sm:$0xf]
  %v44 = vld [vmem:[%s2] sm:$0x1]
  %v46 = vlaneseq
  %v47 = vshrl.u32 %v46, 7
  %v48 = vsub.s32 0, %v47
  %v49 = vrot.slane %v44, %v48
  %v59 = vunpack.c.l.b16 %v32
  %v60 = vunpack.c.l.b16 %v33
  %v61 = vunpack.c.l.b16 %v34
  %v62 = vunpack.c.l.b16 %v35
  %v63 = vunpack.c.l.b16 %v36
  %v64 = vunpack.c.l.b16 %v37
  %v65 = vunpack.c.l.b16 %v38
  %v66 = vunpack.c.l.b16 %v39
  %v67 = vpack.c.b16 %v60, %v59
  %v68 = vpack.c.b16 %v62, %v61
  %v69 = vpack.c.b16 %v64, %v63
  %v70 = vpack.c.b16 %v66, %v65
  %v75 = vunpack.c.l.b16 %v40
  %v76 = vunpack.c.l.b16 %v41
  %v77 = vunpack.c.l.b16 %v42
  %v78 = vunpack.c.l.b16 %v43
  %v79 = vpack.c.b16 %v76, %v75
  %v80 = vpack.c.b16 %v78, %v77
  %vm83 = vcmask 261120
  %v85 = vsel %vm83, %v67, 0
  %v88 = vsel %vm83, %v68, 0
  %v91 = vsel %vm83, %v69, 0
  %v94 = vsel %vm83, %v70, 0
  %96 = vmatprep.subr.bf16.mxu0 0
  %97 = vmatpush1.bf16.msra.mxu0 %v79
  %98 = vmatprep.subr.bf16.mxu0 0
  %99 = vmatpush1.bf16.msra.mxu0 %v80
  %100 = vmatprep.subr.bf16.mxu0 0
  %101 = vmatpush1.bf16.msra.mxu0 0
  %102 = vmatprep.subr.bf16.mxu0 0
  %103 = vmatpush1.bf16.msra.mxu0 0
  %104 = vmatprep.subr.bf16.mxu0 0
  %105 = vmatpush1.bf16.msra.mxu0 0
  %106 = vmatprep.subr.bf16.mxu0 0
  %107 = vmatpush1.bf16.msra.mxu0 0
  %108 = vmatprep.subr.bf16.mxu0 0
  %109 = vmatpush1.bf16.msra.mxu0 0
  %110 = vmatprep.subr.bf16.mxu0 0
  %111 = vmatpush1.bf16.msra.mxu0 0
  %112 = vmatprep.subr.bf16.mxu0 0
  %113 = vmatpush1.bf16.msra.mxu0 0
  %114 = vmatprep.subr.bf16.mxu0 0
  %115 = vmatpush1.bf16.msra.mxu0 0
  %116 = vmatprep.subr.bf16.mxu0 0
  %117 = vmatpush1.bf16.msra.mxu0 0
  %118 = vmatprep.subr.bf16.mxu0 0
  %119 = vmatpush1.bf16.msra.mxu0 0
  %120 = vmatprep.subr.bf16.mxu0 0
  %121 = vmatpush1.bf16.msra.mxu0 0
  %122 = vmatprep.subr.bf16.mxu0 0
  %123 = vmatpush1.bf16.msra.mxu0 0
  %124 = vmatprep.subr.bf16.mxu0 0
  %125 = vmatpush1.bf16.msra.mxu0 0
  %126 = vmatprep.subr.bf16.mxu0 0
  %127 = vmatpush1.bf16.msra.mxu0 0
  %128 = vmatprep.mubr.bf16.mxu0 0
  %129 = vmatmul.mubr.bf16.gmra.mrb[0].mxu0 %v85
  %v130 = vpop.f32.mrb[0].mxu0
  %v131 = vadd.f32 %v49, %v130
  %v132 = vpop.f32.mrb[0].mxu0
  %v133 = vpop.f32.mrb[0].mxu0
  %v134 = vadd.f32 %v49, %v133
  %v135 = vpop.f32.mrb[0].mxu0
  %136 = vmatprep.mubr.bf16.mxu0 0
  %137 = vmatmul.mubr.bf16.gmra.mrb[0].mxu0 %v88
  %v138 = vpop.f32.mrb[0].mxu0
  %v139 = vadd.f32 %v49, %v138
  %v140 = vpop.f32.mrb[0].mxu0
  %v141 = vpop.f32.mrb[0].mxu0
  %v142 = vadd.f32 %v49, %v141
  %v143 = vpop.f32.mrb[0].mxu0
  %144 = vmatprep.mubr.bf16.mxu0 0
  %145 = vmatmul.mubr.bf16.gmra.mrb[0].mxu0 %v91
  %v146 = vpop.f32.mrb[0].mxu0
  %v147 = vadd.f32 %v49, %v146
  %v148 = vpop.f32.mrb[0].mxu0
  %v149 = vpop.f32.mrb[0].mxu0
  %v150 = vadd.f32 %v49, %v149
  %v151 = vpop.f32.mrb[0].mxu0
  %152 = vmatprep.mubr.bf16.mxu0 0
  %153 = vmatmul.mubr.bf16.gmra.mrb[0].mxu0 %v94
  %v154 = vpop.f32.mrb[0].mxu0
  %v155 = vadd.f32 %v49, %v154
  %v156 = vpop.f32.mrb[0].mxu0
  %v157 = vpop.f32.mrb[0].mxu0
  %v158 = vadd.f32 %v49, %v157
  %v159 = vpop.f32.mrb[0].mxu0
  %160 = vdwg.mxu0
  %161 = vst [vmem:[#allocation2] sm:$0xff] %v131
  %162 = vst [vmem:[#allocation2 + $0x8] sm:$0xff] %v134
  %163 = vst [vmem:[#allocation2 + $0x10] sm:$0xff] %v139
  %164 = vst [vmem:[#allocation2 + $0x18] sm:$0xff] %v142
  %165 = vst [vmem:[#allocation2 + $0x20] sm:$0xff] %v147
  %166 = vst [vmem:[#allocation2 + $0x28] sm:$0xff] %v150
  %167 = vst [vmem:[#allocation2 + $0x30] sm:$0xff] %v155
  %168 = vst [vmem:[#allocation2 + $0x38] sm:$0xff] %v158
  %v169 = vld [vmem:[%s5] sm:$0x1]
  %v170 = vld [vmem:[#allocation2] sm:$0xff]
  %v171 = vxor.u32 %v170, 2147483648
  %v172 = vmul.f32 %v171, 1.442695
  %v173 = vpow.pop %v172
  %v174 = vadd.f32 %v173, 1.0
  %v175 = vrcp.pop %v174
  %v176 = vmul.f32 1.0, %v175
  %v177 = vtanh.pop %v170
  %v178 = vmul.f32 %v176, 0.0
  %180 = vrot.lane.b32.xlu0 %v177, 64
  %v181 = vpop.permute.xlu0 %180
  %v183 = vmul.f32 %v176, %v181
  %185 = vrot.lane.b32.xlu0 %v183, 32
  %v186 = vpop.permute.xlu0 %185
  %v188 = vadd.f32 %v178, %v186
  %v189 = vtanh.pop %v188
  %191 = vrot.lane.b32.xlu0 %v189, 64
  %v192 = vpop.permute.xlu0 %191
  %v194 = vmul.f32 %v176, %v192
  %v195 = vpack.c.bf16 %v194, %v194
  %v196 = vld [vmem:[%s3] sm:$0xff]
  %v197 = vld [vmem:[%s3 + $0x8] sm:$0xff]
  %v198 = vld [vmem:[%s3 + $0x10] sm:$0xff]
  %v199 = vld [vmem:[%s3 + $0x18] sm:$0xff]
  %201 = vrot.lane.b32.xlu0 %v195, 32
  %v202 = vpop.permute.xlu0 %201
  %v207 = vunpack.c.l.b16 %v196
  %v208 = vunpack.c.h.b16 %v196
  %v209 = vunpack.c.l.b16 %v197
  %v210 = vunpack.c.h.b16 %v197
  %v211 = vunpack.c.l.b16 %v198
  %v212 = vunpack.c.h.b16 %v198
  %v213 = vunpack.c.l.b16 %v199
  %v214 = vunpack.c.h.b16 %v199
  %v215 = vpack.c.b16 %v209, %v207
  %v216 = vpack.c.b16 %v210, %v208
  %v217 = vpack.c.b16 %v213, %v211
  %v218 = vpack.c.b16 %v214, %v212
  %v224 = vsel %vm83, %v202, 0
  %226 = vmatprep.subr.bf16.mxu0 %v216
  %227 = vmatpush1.bf16.msra.mxu0 %v215
  %228 = vmatprep.subr.bf16.mxu0 %v218
  %229 = vmatpush1.bf16.msra.mxu0 %v217
  %230 = vmatprep.subr.bf16.mxu0 0
  %231 = vmatpush1.bf16.msra.mxu0 0
  %232 = vmatprep.subr.bf16.mxu0 0
  %233 = vmatpush1.bf16.msra.mxu0 0
  %234 = vmatprep.subr.bf16.mxu0 0
  %235 = vmatpush1.bf16.msra.mxu0 0
  %236 = vmatprep.subr.bf16.mxu0 0
  %237 = vmatpush1.bf16.msra.mxu0 0
  %238 = vmatprep.subr.bf16.mxu0 0
  %239 = vmatpush1.bf16.msra.mxu0 0
  %240 = vmatprep.subr.bf16.mxu0 0
  %241 = vmatpush1.bf16.msra.mxu0 0
  %242 = vmatprep.subr.bf16.mxu0 0
  %243 = vmatpush1.bf16.msra.mxu0 0
  %244 = vmatprep.subr.bf16.mxu0 0
  %245 = vmatpush1.bf16.msra.mxu0 0
  %246 = vmatprep.subr.bf16.mxu0 0
  %247 = vmatpush1.bf16.msra.mxu0 0
  %248 = vmatprep.subr.bf16.mxu0 0
  %249 = vmatpush1.bf16.msra.mxu0 0
  %250 = vmatprep.subr.bf16.mxu0 0
  %251 = vmatpush1.bf16.msra.mxu0 0
  %252 = vmatprep.subr.bf16.mxu0 0
  %253 = vmatpush1.bf16.msra.mxu0 0
  %254 = vmatprep.subr.bf16.mxu0 0
  %255 = vmatpush1.bf16.msra.mxu0 0
  %256 = vmatprep.subr.bf16.mxu0 0
  %257 = vmatpush1.bf16.msra.mxu0 0
  %258 = vmatprep.mubr.bf16.mxu0 0
  %259 = vmatmul.mubr.bf16.gmra.mrb[0].mxu0 %v224
  %v260 = vpop.f32.mrb[0].mxu0
  %v261 = vadd.f32 0.0, %v260
  %v262 = vpop.f32.mrb[0].mxu0
  %v263 = vadd.f32 0.0, %v262
  %v264 = vpop.f32.mrb[0].mxu0
  %v265 = vpop.f32.mrb[0].mxu0
  %266 = vdwg.mxu0
  %v267 = vld [vmem:[%s4] sm:$0xf]
  %v268 = vld [vmem:[%s4 + $0x4] sm:$0xf]
  %v269 = vld [vmem:[%s4 + $0x8] sm:$0xf]
  %v270 = vld [vmem:[%s4 + $0xc] sm:$0xf]
  %v275 = vunpack.c.l.b16 %v267
  %v276 = vunpack.c.l.b16 %v268
  %v277 = vunpack.c.l.b16 %v269
  %v278 = vunpack.c.l.b16 %v270
  %v279 = vpack.c.b16 %v276, %v275
  %v280 = vpack.c.b16 %v278, %v277
  %v284 = vsel %vm83, 0, 0
  %286 = vmatprep.subr.bf16.mxu0 0
  %287 = vmatpush1.bf16.msra.mxu0 %v279
  %288 = vmatprep.subr.bf16.mxu0 0
  %289 = vmatpush1.bf16.msra.mxu0 %v280
  %290 = vmatprep.subr.bf16.mxu0 0
  %291 = vmatpush1.bf16.msra.mxu0 0
  %292 = vmatprep.subr.bf16.mxu0 0
  %293 = vmatpush1.bf16.msra.mxu0 0
  %294 = vmatprep.subr.bf16.mxu0 0
  %295 = vmatpush1.bf16.msra.mxu0 0
  %296 = vmatprep.subr.bf16.mxu0 0
  %297 = vmatpush1.bf16.msra.mxu0 0
  %298 = vmatprep.subr.bf16.mxu0 0
  %299 = vmatpush1.bf16.msra.mxu0 0
  %300 = vmatprep.subr.bf16.mxu0 0
  %301 = vmatpush1.bf16.msra.mxu0 0
  %302 = vmatprep.subr.bf16.mxu0 0
  %303 = vmatpush1.bf16.msra.mxu0 0
  %304 = vmatprep.subr.bf16.mxu0 0
  %305 = vmatpush1.bf16.msra.mxu0 0
  %306 = vmatprep.subr.bf16.mxu0 0
  %307 = vmatpush1.bf16.msra.mxu0 0
  %308 = vmatprep.subr.bf16.mxu0 0
  %309 = vmatpush1.bf16.msra.mxu0 0
  %310 = vmatprep.subr.bf16.mxu0 0
  %311 = vmatpush1.bf16.msra.mxu0 0
  %312 = vmatprep.subr.bf16.mxu0 0
  %313 = vmatpush1.bf16.msra.mxu0 0
  %314 = vmatprep.subr.bf16.mxu0 0
  %315 = vmatpush1.bf16.msra.mxu0 0
  %316 = vmatprep.subr.bf16.mxu0 0
  %317 = vmatpush1.bf16.msra.mxu0 0
  %318 = vmatprep.mubr.bf16.mxu0 0
  %319 = vmatmul.mubr.bf16.gmra.mrb[0].mxu0 %v284
  %v320 = vpop.f32.mrb[0].mxu0
  %v321 = vadd.f32 0.0, %v320
  %v322 = vpop.f32.mrb[0].mxu0
  %v323 = vpop.f32.mrb[0].mxu0
  %v324 = vpop.f32.mrb[0].mxu0
  %325 = vdwg.mxu0
  %v326 = vadd.f32 %v263, %v321
  %v328 = vlaneseq
  %v329 = vshrl.u32 %v328, 7
  %v330 = vsub.s32 0, %v329
  %v331 = vrot.slane %v169, %v330
  %v333 = vadd.f32 %v326, %v331
  %v334 = vxor.u32 %v333, 2147483648
  %v335 = vmul.f32 %v334, 1.442695
  %v336 = vpow.pop %v335
  %v337 = vadd.f32 %v336, 1.0
  %v338 = vrcp.pop %v337
  %v339 = vmul.f32 1.0, %v338
  %v340 = vtanh.pop %v333
  %v341 = vmul.f32 %v339, 0.0
  %343 = vrot.lane.b32.xlu0 %v340, 64
  %v344 = vpop.permute.xlu0 %343
  %v346 = vmul.f32 %v339, %v344
  %348 = vrot.lane.b32.xlu0 %v346, 32
  %v349 = vpop.permute.xlu0 %348
  %v351 = vadd.f32 %v341, %v349
  %v352 = vtanh.pop %v351
  %354 = vrot.lane.b32.xlu0 %v352, 64
  %v355 = vpop.permute.xlu0 %354
  %v357 = vmul.f32 %v339, %v355
  %v358 = vld [vmem:[#allocation2 + $0x8] sm:$0xff]
  %v359 = vadd.f32 %v358, %v261
  %v360 = vxor.u32 %v359, 2147483648
  %v361 = vmul.f32 %v360, 1.442695
  %v362 = vpow.pop %v361
  %v363 = vadd.f32 %v362, 1.0
  %v364 = vrcp.pop %v363
  %v365 = vmul.f32 1.0, %v364
  %v366 = vtanh.pop %v359
  %v367 = vmul.f32 %v365, %v188
  %369 = vrot.lane.b32.xlu0 %v366, 64
  %v370 = vpop.permute.xlu0 %369
  %v372 = vmul.f32 %v365, %v370
  %374 = vrot.lane.b32.xlu0 %v372, 32
  %v375 = vpop.permute.xlu0 %374
  %v377 = vadd.f32 %v367, %v375
  %v378 = vtanh.pop %v377
  %380 = vrot.lane.b32.xlu0 %v378, 64
  %v381 = vpop.permute.xlu0 %380
  %v383 = vmul.f32 %v365, %v381
  %v384 = vpack.c.bf16 %v383, %v383
  %386 = vrot.lane.b32.xlu0 %v384, 32
  %v387 = vpop.permute.xlu0 %386
  %v389 = vsel %vm83, %v387, 0
  %391 = vmatprep.subr.bf16.mxu0 %v216
  %392 = vmatpush1.bf16.msra.mxu0 %v215
  %393 = vmatprep.subr.bf16.mxu0 %v218
  %394 = vmatpush1.bf16.msra.mxu0 %v217
  %395 = vmatprep.subr.bf16.mxu0 0
  %396 = vmatpush1.bf16.msra.mxu0 0
  %397 = vmatprep.subr.bf16.mxu0 0
  %398 = vmatpush1.bf16.msra.mxu0 0
  %399 = vmatprep.subr.bf16.mxu0 0
  %400 = vmatpush1.bf16.msra.mxu0 0
  %401 = vmatprep.subr.bf16.mxu0 0
  %402 = vmatpush1.bf16.msra.mxu0 0
  %403 = vmatprep.subr.bf16.mxu0 0
  %404 = vmatpush1.bf16.msra.mxu0 0
  %405 = vmatprep.subr.bf16.mxu0 0
  %406 = vmatpush1.bf16.msra.mxu0 0
  %407 = vmatprep.subr.bf16.mxu0 0
  %408 = vmatpush1.bf16.msra.mxu0 0
  %409 = vmatprep.subr.bf16.mxu0 0
  %410 = vmatpush1.bf16.msra.mxu0 0
  %411 = vmatprep.subr.bf16.mxu0 0
  %412 = vmatpush1.bf16.msra.mxu0 0
  %413 = vmatprep.subr.bf16.mxu0 0
  %414 = vmatpush1.bf16.msra.mxu0 0
  %415 = vmatprep.subr.bf16.mxu0 0
  %416 = vmatpush1.bf16.msra.mxu0 0
  %417 = vmatprep.subr.bf16.mxu0 0
  %418 = vmatpush1.bf16.msra.mxu0 0
  %419 = vmatprep.subr.bf16.mxu0 0
  %420 = vmatpush1.bf16.msra.mxu0 0
  %421 = vmatprep.subr.bf16.mxu0 0
  %422 = vmatpush1.bf16.msra.mxu0 0
  %423 = vmatprep.mubr.bf16.mxu0 0
  %424 = vmatmul.mubr.bf16.gmra.mrb[0].mxu0 %v389
  %v425 = vpop.f32.mrb[0].mxu0
  %v426 = vadd.f32 0.0, %v425
  %v427 = vpop.f32.mrb[0].mxu0
  %v428 = vadd.f32 0.0, %v427
  %v429 = vpop.f32.mrb[0].mxu0
  %v430 = vpop.f32.mrb[0].mxu0
  %431 = vdwg.mxu0
  %v432 = vpack.c.bf16 %v357, %v357
  %434 = vrot.lane.b32.xlu0 %v432, 32
  %v435 = vpop.permute.xlu0 %434
  %v437 = vsel %vm83, %v435, 0
  %439 = vmatprep.subr.bf16.mxu0 0
  %440 = vmatpush1.bf16.msra.mxu0 %v279
  %441 = vmatprep.subr.bf16.mxu0 0
  %442 = vmatpush1.bf16.msra.mxu0 %v280
  %443 = vmatprep.subr.bf16.mxu0 0
  %444 = vmatpush1.bf16.msra.mxu0 0
  %445 = vmatprep.subr.bf16.mxu0 0
  %446 = vmatpush1.bf16.msra.mxu0 0
  %447 = vmatprep.subr.bf16.mxu0 0
  %448 = vmatpush1.bf16.msra.mxu0 0
  %449 = vmatprep.subr.bf16.mxu0 0
  %450 = vmatpush1.bf16.msra.mxu0 0
  %451 = vmatprep.subr.bf16.mxu0 0
  %452 = vmatpush1.bf16.msra.mxu0 0
  %453 = vmatprep.subr.bf16.mxu0 0
  %454 = vmatpush1.bf16.msra.mxu0 0
  %455 = vmatprep.subr.bf16.mxu0 0
  %456 = vmatpush1.bf16.msra.mxu0 0
  %457 = vmatprep.subr.bf16.mxu0 0
  %458 = vmatpush1.bf16.msra.mxu0 0
  %459 = vmatprep.subr.bf16.mxu0 0
  %460 = vmatpush1.bf16.msra.mxu0 0
  %461 = vmatprep.subr.bf16.mxu0 0
  %462 = vmatpush1.bf16.msra.mxu0 0
  %463 = vmatprep.subr.bf16.mxu0 0
  %464 = vmatpush1.bf16.msra.mxu0 0
  %465 = vmatprep.subr.bf16.mxu0 0
  %466 = vmatpush1.bf16.msra.mxu0 0
  %467 = vmatprep.subr.bf16.mxu0 0
  %468 = vmatpush1.bf16.msra.mxu0 0
  %469 = vmatprep.subr.bf16.mxu0 0
  %470 = vmatpush1.bf16.msra.mxu0 0
  %471 = vmatprep.mubr.bf16.mxu0 0
  %472 = vmatmul.mubr.bf16.gmra.mrb[0].mxu0 %v437
  %v473 = vpop.f32.mrb[0].mxu0
  %v474 = vadd.f32 0.0, %v473
  %v475 = vpop.f32.mrb[0].mxu0
  %v476 = vpop.f32.mrb[0].mxu0
  %v477 = vpop.f32.mrb[0].mxu0
  %478 = vdwg.mxu0
  %v479 = vadd.f32 %v428, %v474
  %v480 = vadd.f32 %v479, %v331
  %v481 = vxor.u32 %v480, 2147483648
  %v482 = vmul.f32 %v481, 1.442695
  %v483 = vpow.pop %v482
  %v484 = vadd.f32 %v483, 1.0
  %v485 = vrcp.pop %v484
  %v486 = vmul.f32 1.0, %v485
  %v487 = vtanh.pop %v480
  %v488 = vmul.f32 %v486, %v351
  %490 = vrot.lane.b32.xlu0 %v487, 64
  %v491 = vpop.permute.xlu0 %490
  %v493 = vmul.f32 %v486, %v491
  %495 = vrot.lane.b32.xlu0 %v493, 32
  %v496 = vpop.permute.xlu0 %495
  %v498 = vadd.f32 %v488, %v496
  %v499 = vtanh.pop %v498
  %501 = vrot.lane.b32.xlu0 %v499, 64
  %v502 = vpop.permute.xlu0 %501
  %v504 = vmul.f32 %v486, %v502
  %v505 = vld [vmem:[#allocation2 + $0x10] sm:$0xff]
  %v506 = vadd.f32 %v505, %v426
  %v507 = vxor.u32 %v506, 2147483648
  %v508 = vmul.f32 %v507, 1.442695
  %v509 = vpow.pop %v508
  %v510 = vadd.f32 %v509, 1.0
  %v511 = vrcp.pop %v510
  %v512 = vmul.f32 1.0, %v511
  %v513 = vtanh.pop %v506
  %v514 = vmul.f32 %v512, %v377
  %516 = vrot.lane.b32.xlu0 %v513, 64
  %v517 = vpop.permute.xlu0 %516
  %v519 = vmul.f32 %v512, %v517
  %521 = vrot.lane.b32.xlu0 %v519, 32
  %v522 = vpop.permute.xlu0 %521
  %v524 = vadd.f32 %v514, %v522
  %v525 = vtanh.pop %v524
  %527 = vrot.lane.b32.xlu0 %v525, 64
  %v528 = vpop.permute.xlu0 %527
  %v530 = vmul.f32 %v512, %v528
  %v531 = vpack.c.bf16 %v530, %v530
  %533 = vrot.lane.b32.xlu0 %v531, 32
  %v534 = vpop.permute.xlu0 %533
  %v536 = vsel %vm83, %v534, 0
  %538 = vmatprep.subr.bf16.mxu0 %v216
  %539 = vmatpush1.bf16.msra.mxu0 %v215
  %540 = vmatprep.subr.bf16.mxu0 %v218
  %541 = vmatpush1.bf16.msra.mxu0 %v217
  %542 = vmatprep.subr.bf16.mxu0 0
  %543 = vmatpush1.bf16.msra.mxu0 0
  %544 = vmatprep.subr.bf16.mxu0 0
  %545 = vmatpush1.bf16.msra.mxu0 0
  %546 = vmatprep.subr.bf16.mxu0 0
  %547 = vmatpush1.bf16.msra.mxu0 0
  %548 = vmatprep.subr.bf16.mxu0 0
  %549 = vmatpush1.bf16.msra.mxu0 0
  %550 = vmatprep.subr.bf16.mxu0 0
  %551 = vmatpush1.bf16.msra.mxu0 0
  %552 = vmatprep.subr.bf16.mxu0 0
  %553 = vmatpush1.bf16.msra.mxu0 0
  %554 = vmatprep.subr.bf16.mxu0 0
  %555 = vmatpush1.bf16.msra.mxu0 0
  %556 = vmatprep.subr.bf16.mxu0 0
  %557 = vmatpush1.bf16.msra.mxu0 0
  %558 = vmatprep.subr.bf16.mxu0 0
  %559 = vmatpush1.bf16.msra.mxu0 0
  %560 = vmatprep.subr.bf16.mxu0 0
  %561 = vmatpush1.bf16.msra.mxu0 0
  %562 = vmatprep.subr.bf16.mxu0 0
  %563 = vmatpush1.bf16.msra.mxu0 0
  %564 = vmatprep.subr.bf16.mxu0 0
  %565 = vmatpush1.bf16.msra.mxu0 0
  %566 = vmatprep.subr.bf16.mxu0 0
  %567 = vmatpush1.bf16.msra.mxu0 0
  %568 = vmatprep.subr.bf16.mxu0 0
  %569 = vmatpush1.bf16.msra.mxu0 0
  %570 = vmatprep.mubr.bf16.mxu0 0
  %571 = vmatmul.mubr.bf16.gmra.mrb[0].mxu0 %v536
  %v572 = vpop.f32.mrb[0].mxu0
  %v573 = vadd.f32 0.0, %v572
  %v574 = vpop.f32.mrb[0].mxu0
  %v575 = vadd.f32 0.0, %v574
  %v576 = vpop.f32.mrb[0].mxu0
  %v577 = vpop.f32.mrb[0].mxu0
  %578 = vdwg.mxu0
  %v579 = vpack.c.bf16 %v504, %v504
  %581 = vrot.lane.b32.xlu0 %v579, 32
  %v582 = vpop.permute.xlu0 %581
  %v584 = vsel %vm83, %v582, 0
  %586 = vmatprep.subr.bf16.mxu0 0
  %587 = vmatpush1.bf16.msra.mxu0 %v279
  %588 = vmatprep.subr.bf16.mxu0 0
  %589 = vmatpush1.bf16.msra.mxu0 %v280
  %590 = vmatprep.subr.bf16.mxu0 0
  %591 = vmatpush1.bf16.msra.mxu0 0
  %592 = vmatprep.subr.bf16.mxu0 0
  %593 = vmatpush1.bf16.msra.mxu0 0
  %594 = vmatprep.subr.bf16.mxu0 0
  %595 = vmatpush1.bf16.msra.mxu0 0
  %596 = vmatprep.subr.bf16.mxu0 0
  %597 = vmatpush1.bf16.msra.mxu0 0
  %598 = vmatprep.subr.bf16.mxu0 0
  %599 = vmatpush1.bf16.msra.mxu0 0
  %600 = vmatprep.subr.bf16.mxu0 0
  %601 = vmatpush1.bf16.msra.mxu0 0
  %602 = vmatprep.subr.bf16.mxu0 0
  %603 = vmatpush1.bf16.msra.mxu0 0
  %604 = vmatprep.subr.bf16.mxu0 0
  %605 = vmatpush1.bf16.msra.mxu0 0
  %606 = vmatprep.subr.bf16.mxu0 0
  %607 = vmatpush1.bf16.msra.mxu0 0
  %608 = vmatprep.subr.bf16.mxu0 0
  %609 = vmatpush1.bf16.msra.mxu0 0
  %610 = vmatprep.subr.bf16.mxu0 0
  %611 = vmatpush1.bf16.msra.mxu0 0
  %612 = vmatprep.subr.bf16.mxu0 0
  %613 = vmatpush1.bf16.msra.mxu0 0
  %614 = vmatprep.subr.bf16.mxu0 0
  %615 = vmatpush1.bf16.msra.mxu0 0
  %616 = vmatprep.subr.bf16.mxu0 0
  %617 = vmatpush1.bf16.msra.mxu0 0
  %618 = vmatprep.mubr.bf16.mxu0 0
  %619 = vmatmul.mubr.bf16.gmra.mrb[0].mxu0 %v584
  %v620 = vpop.f32.mrb[0].mxu0
  %v621 = vadd.f32 0.0, %v620
  %v622 = vpop.f32.mrb[0].mxu0
  %v623 = vpop.f32.mrb[0].mxu0
  %v624 = vpop.f32.mrb[0].mxu0
  %625 = vdwg.mxu0
  %v626 = vadd.f32 %v575, %v621
  %v627 = vadd.f32 %v626, %v331
  %v628 = vxor.u32 %v627, 2147483648
  %v629 = vmul.f32 %v628, 1.442695
  %v630 = vpow.pop %v629
  %v631 = vadd.f32 %v630, 1.0
  %v632 = vrcp.pop %v631
  %v633 = vmul.f32 1.0, %v632
  %v634 = vtanh.pop %v627
  %v635 = vmul.f32 %v633, %v498
  %637 = vrot.lane.b32.xlu0 %v634, 64
  %v638 = vpop.permute.xlu0 %637
  %v640 = vmul.f32 %v633, %v638
  %642 = vrot.lane.b32.xlu0 %v640, 32
  %v643 = vpop.permute.xlu0 %642
  %v645 = vadd.f32 %v635, %v643
  %v646 = vtanh.pop %v645
  %648 = vrot.lane.b32.xlu0 %v646, 64
  %v649 = vpop.permute.xlu0 %648
  %v651 = vmul.f32 %v633, %v649
  %v652 = vld [vmem:[#allocation2 + $0x18] sm:$0xff]
  %v653 = vadd.f32 %v652, %v573
  %v654 = vxor.u32 %v653, 2147483648
  %v655 = vmul.f32 %v654, 1.442695
  %v656 = vpow.pop %v655
  %v657 = vadd.f32 %v656, 1.0
  %v658 = vrcp.pop %v657
  %v659 = vmul.f32 1.0, %v658
  %v660 = vtanh.pop %v653
  %v661 = vmul.f32 %v659, %v524
  %663 = vrot.lane.b32.xlu0 %v660, 64
  %v664 = vpop.permute.xlu0 %663
  %v666 = vmul.f32 %v659, %v664
  %668 = vrot.lane.b32.xlu0 %v666, 32
  %v669 = vpop.permute.xlu0 %668
  %v671 = vadd.f32 %v661, %v669
  %v672 = vtanh.pop %v671
  %674 = vrot.lane.b32.xlu0 %v672, 64
  %v675 = vpop.permute.xlu0 %674
  %v677 = vmul.f32 %v659, %v675
  %v678 = vpack.c.bf16 %v677, %v677
  %680 = vrot.lane.b32.xlu0 %v678, 32
  %v681 = vpop.permute.xlu0 %680
  %v683 = vsel %vm83, %v681, 0
  %685 = vmatprep.subr.bf16.mxu0 %v216
  %686 = vmatpush1.bf16.msra.mxu0 %v215
  %687 = vmatprep.subr.bf16.mxu0 %v218
  %688 = vmatpush1.bf16.msra.mxu0 %v217
  %689 = vmatprep.subr.bf16.mxu0 0
  %690 = vmatpush1.bf16.msra.mxu0 0
  %691 = vmatprep.subr.bf16.mxu0 0
  %692 = vmatpush1.bf16.msra.mxu0 0
  %693 = vmatprep.subr.bf16.mxu0 0
  %694 = vmatpush1.bf16.msra.mxu0 0
  %695 = vmatprep.subr.bf16.mxu0 0
  %696 = vmatpush1.bf16.msra.mxu0 0
  %697 = vmatprep.subr.bf16.mxu0 0
  %698 = vmatpush1.bf16.msra.mxu0 0
  %699 = vmatprep.subr.bf16.mxu0 0
  %700 = vmatpush1.bf16.msra.mxu0 0
  %701 = vmatprep.subr.bf16.mxu0 0
  %702 = vmatpush1.bf16.msra.mxu0 0
  %703 = vmatprep.subr.bf16.mxu0 0
  %704 = vmatpush1.bf16.msra.mxu0 0
  %705 = vmatprep.subr.bf16.mxu0 0
  %706 = vmatpush1.bf16.msra.mxu0 0
  %707 = vmatprep.subr.bf16.mxu0 0
  %708 = vmatpush1.bf16.msra.mxu0 0
  %709 = vmatprep.subr.bf16.mxu0 0
  %710 = vmatpush1.bf16.msra.mxu0 0
  %711 = vmatprep.subr.bf16.mxu0 0
  %712 = vmatpush1.bf16.msra.mxu0 0
  %713 = vmatprep.subr.bf16.mxu0 0
  %714 = vmatpush1.bf16.msra.mxu0 0
  %715 = vmatprep.subr.bf16.mxu0 0
  %716 = vmatpush1.bf16.msra.mxu0 0
  %717 = vmatprep.mubr.bf16.mxu0 0
  %718 = vmatmul.mubr.bf16.gmra.mrb[0].mxu0 %v683
  %v719 = vpop.f32.mrb[0].mxu0
  %v720 = vadd.f32 0.0, %v719
  %v721 = vpop.f32.mrb[0].mxu0
  %v722 = vadd.f32 0.0, %v721
  %v723 = vpop.f32.mrb[0].mxu0
  %v724 = vpop.f32.mrb[0].mxu0
  %725 = vdwg.mxu0
  %v726 = vpack.c.bf16 %v651, %v651
  %728 = vrot.lane.b32.xlu0 %v726, 32
  %v729 = vpop.permute.xlu0 %728
  %v731 = vsel %vm83, %v729, 0
  %733 = vmatprep.subr.bf16.mxu0 0
  %734 = vmatpush1.bf16.msra.mxu0 %v279
  %735 = vmatprep.subr.bf16.mxu0 0
  %736 = vmatpush1.bf16.msra.mxu0 %v280
  %737 = vmatprep.subr.bf16.mxu0 0
  %738 = vmatpush1.bf16.msra.mxu0 0
  %739 = vmatprep.subr.bf16.mxu0 0
  %740 = vmatpush1.bf16.msra.mxu0 0
  %741 = vmatprep.subr.bf16.mxu0 0
  %742 = vmatpush1.bf16.msra.mxu0 0
  %743 = vmatprep.subr.bf16.mxu0 0
  %744 = vmatpush1.bf16.msra.mxu0 0
  %745 = vmatprep.subr.bf16.mxu0 0
  %746 = vmatpush1.bf16.msra.mxu0 0
  %747 = vmatprep.subr.bf16.mxu0 0
  %748 = vmatpush1.bf16.msra.mxu0 0
  %749 = vmatprep.subr.bf16.mxu0 0
  %750 = vmatpush1.bf16.msra.mxu0 0
  %751 = vmatprep.subr.bf16.mxu0 0
  %752 = vmatpush1.bf16.msra.mxu0 0
  %753 = vmatprep.subr.bf16.mxu0 0
  %754 = vmatpush1.bf16.msra.mxu0 0
  %755 = vmatprep.subr.bf16.mxu0 0
  %756 = vmatpush1.bf16.msra.mxu0 0
  %757 = vmatprep.subr.bf16.mxu0 0
  %758 = vmatpush1.bf16.msra.mxu0 0
  %759 = vmatprep.subr.bf16.mxu0 0
  %760 = vmatpush1.bf16.msra.mxu0 0
  %761 = vmatprep.subr.bf16.mxu0 0
  %762 = vmatpush1.bf16.msra.mxu0 0
  %763 = vmatprep.subr.bf16.mxu0 0
  %764 = vmatpush1.bf16.msra.mxu0 0
  %765 = vmatprep.mubr.bf16.mxu0 0
  %766 = vmatmul.mubr.bf16.gmra.mrb[0].mxu0 %v731
  %v767 = vpop.f32.mrb[0].mxu0
  %v768 = vadd.f32 0.0, %v767
  %v769 = vpop.f32.mrb[0].mxu0
  %v770 = vpop.f32.mrb[0].mxu0
  %v771 = vpop.f32.mrb[0].mxu0
  %772 = vdwg.mxu0
  %v773 = vadd.f32 %v722, %v768
  %v774 = vadd.f32 %v773, %v331
  %v775 = vxor.u32 %v774, 2147483648
  %v776 = vmul.f32 %v775, 1.442695
  %v777 = vpow.pop %v776
  %v778 = vadd.f32 %v777, 1.0
  %v779 = vrcp.pop %v778
  %v780 = vmul.f32 1.0, %v779
  %v781 = vtanh.pop %v774
  %v782 = vmul.f32 %v780, %v645
  %784 = vrot.lane.b32.xlu0 %v781, 64
  %v785 = vpop.permute.xlu0 %784
  %v787 = vmul.f32 %v780, %v785
  %789 = vrot.lane.b32.xlu0 %v787, 32
  %v790 = vpop.permute.xlu0 %789
  %v792 = vadd.f32 %v782, %v790
  %v793 = vtanh.pop %v792
  %795 = vrot.lane.b32.xlu0 %v793, 64
  %v796 = vpop.permute.xlu0 %795
  %v798 = vmul.f32 %v780, %v796
  %v799 = vld [vmem:[#allocation2 + $0x20] sm:$0xff]
  %v800 = vadd.f32 %v799, %v720
  %v801 = vxor.u32 %v800, 2147483648
  %v802 = vmul.f32 %v801, 1.442695
  %v803 = vpow.pop %v802
  %v804 = vadd.f32 %v803, 1.0
  %v805 = vrcp.pop %v804
  %v806 = vmul.f32 1.0, %v805
  %v807 = vtanh.pop %v800
  %v808 = vmul.f32 %v806, %v671
  %810 = vrot.lane.b32.xlu0 %v807, 64
  %v811 = vpop.permute.xlu0 %810
  %v813 = vmul.f32 %v806, %v811
  %815 = vrot.lane.b32.xlu0 %v813, 32
  %v816 = vpop.permute.xlu0 %815
  %v818 = vadd.f32 %v808, %v816
  %v819 = vtanh.pop %v818
  %821 = vrot.lane.b32.xlu0 %v819, 64
  %v822 = vpop.permute.xlu0 %821
  %v824 = vmul.f32 %v806, %v822
  %v825 = vpack.c.bf16 %v824, %v824
  %827 = vrot.lane.b32.xlu0 %v825, 32
  %v828 = vpop.permute.xlu0 %827
  %v830 = vsel %vm83, %v828, 0
  %832 = vmatprep.subr.bf16.mxu0 %v216
  %833 = vmatpush1.bf16.msra.mxu0 %v215
  %834 = vmatprep.subr.bf16.mxu0 %v218
  %835 = vmatpush1.bf16.msra.mxu0 %v217
  %836 = vmatprep.subr.bf16.mxu0 0
  %837 = vmatpush1.bf16.msra.mxu0 0
  %838 = vmatprep.subr.bf16.mxu0 0
  %839 = vmatpush1.bf16.msra.mxu0 0
  %840 = vmatprep.subr.bf16.mxu0 0
  %841 = vmatpush1.bf16.msra.mxu0 0
  %842 = vmatprep.subr.bf16.mxu0 0
  %843 = vmatpush1.bf16.msra.mxu0 0
  %844 = vmatprep.subr.bf16.mxu0 0
  %845 = vmatpush1.bf16.msra.mxu0 0
  %846 = vmatprep.subr.bf16.mxu0 0
  %847 = vmatpush1.bf16.msra.mxu0 0
  %848 = vmatprep.subr.bf16.mxu0 0
  %849 = vmatpush1.bf16.msra.mxu0 0
  %850 = vmatprep.subr.bf16.mxu0 0
  %851 = vmatpush1.bf16.msra.mxu0 0
  %852 = vmatprep.subr.bf16.mxu0 0
  %853 = vmatpush1.bf16.msra.mxu0 0
  %854 = vmatprep.subr.bf16.mxu0 0
  %855 = vmatpush1.bf16.msra.mxu0 0
  %856 = vmatprep.subr.bf16.mxu0 0
  %857 = vmatpush1.bf16.msra.mxu0 0
  %858 = vmatprep.subr.bf16.mxu0 0
  %859 = vmatpush1.bf16.msra.mxu0 0
  %860 = vmatprep.subr.bf16.mxu0 0
  %861 = vmatpush1.bf16.msra.mxu0 0
  %862 = vmatprep.subr.bf16.mxu0 0
  %863 = vmatpush1.bf16.msra.mxu0 0
  %864 = vmatprep.mubr.bf16.mxu0 0
  %865 = vmatmul.mubr.bf16.gmra.mrb[0].mxu0 %v830
  %v866 = vpop.f32.mrb[0].mxu0
  %v867 = vadd.f32 0.0, %v866
  %v868 = vpop.f32.mrb[0].mxu0
  %v869 = vadd.f32 0.0, %v868
  %v870 = vpop.f32.mrb[0].mxu0
  %v871 = vpop.f32.mrb[0].mxu0
  %872 = vdwg.mxu0
  %v873 = vpack.c.bf16 %v798, %v798
  %875 = vrot.lane.b32.xlu0 %v873, 32
  %v876 = vpop.permute.xlu0 %875
  %v878 = vsel %vm83, %v876, 0
  %880 = vmatprep.subr.bf16.mxu0 0
  %881 = vmatpush1.bf16.msra.mxu0 %v279
  %882 = vmatprep.subr.bf16.mxu0 0
  %883 = vmatpush1.bf16.msra.mxu0 %v280
  %884 = vmatprep.subr.bf16.mxu0 0
  %885 = vmatpush1.bf16.msra.mxu0 0
  %886 = vmatprep.subr.bf16.mxu0 0
  %887 = vmatpush1.bf16.msra.mxu0 0
  %888 = vmatprep.subr.bf16.mxu0 0
  %889 = vmatpush1.bf16.msra.mxu0 0
  %890 = vmatprep.subr.bf16.mxu0 0
  %891 = vmatpush1.bf16.msra.mxu0 0
  %892 = vmatprep.subr.bf16.mxu0 0
  %893 = vmatpush1.bf16.msra.mxu0 0
  %894 = vmatprep.subr.bf16.mxu0 0
  %895 = vmatpush1.bf16.msra.mxu0 0
  %896 = vmatprep.subr.bf16.mxu0 0
  %897 = vmatpush1.bf16.msra.mxu0 0
  %898 = vmatprep.subr.bf16.mxu0 0
  %899 = vmatpush1.bf16.msra.mxu0 0
  %900 = vmatprep.subr.bf16.mxu0 0
  %901 = vmatpush1.bf16.msra.mxu0 0
  %902 = vmatprep.subr.bf16.mxu0 0
  %903 = vmatpush1.bf16.msra.mxu0 0
  %904 = vmatprep.subr.bf16.mxu0 0
  %905 = vmatpush1.bf16.msra.mxu0 0
  %906 = vmatprep.subr.bf16.mxu0 0
  %907 = vmatpush1.bf16.msra.mxu0 0
  %908 = vmatprep.subr.bf16.mxu0 0
  %909 = vmatpush1.bf16.msra.mxu0 0
  %910 = vmatprep.subr.bf16.mxu0 0
  %911 = vmatpush1.bf16.msra.mxu0 0
  %912 = vmatprep.mubr.bf16.mxu0 0
  %913 = vmatmul.mubr.bf16.gmra.mrb[0].mxu0 %v878
  %v914 = vpop.f32.mrb[0].mxu0
  %v915 = vadd.f32 0.0, %v914
  %v916 = vpop.f32.mrb[0].mxu0
  %v917 = vpop.f32.mrb[0].mxu0
  %v918 = vpop.f32.mrb[0].mxu0
  %919 = vdwg.mxu0
  %v920 = vadd.f32 %v869, %v915
  %v921 = vadd.f32 %v920, %v331
  %v922 = vxor.u32 %v921, 2147483648
  %v923 = vmul.f32 %v922, 1.442695
  %v924 = vpow.pop %v923
  %v925 = vadd.f32 %v924, 1.0
  %v926 = vrcp.pop %v925
  %v927 = vmul.f32 1.0, %v926
  %v928 = vtanh.pop %v921
  %v929 = vmul.f32 %v927, %v792
  %931 = vrot.lane.b32.xlu0 %v928, 64
  %v932 = vpop.permute.xlu0 %931
  %v934 = vmul.f32 %v927, %v932
  %936 = vrot.lane.b32.xlu0 %v934, 32
  %v937 = vpop.permute.xlu0 %936
  %v939 = vadd.f32 %v929, %v937
  %v940 = vtanh.pop %v939
  %942 = vrot.lane.b32.xlu0 %v940, 64
  %v943 = vpop.permute.xlu0 %942
  %v945 = vmul.f32 %v927, %v943
  %v946 = vld [vmem:[#allocation2 + $0x28] sm:$0xff]
  %v947 = vadd.f32 %v946, %v867
  %v948 = vxor.u32 %v947, 2147483648
  %v949 = vmul.f32 %v948, 1.442695
  %v950 = vpow.pop %v949
  %v951 = vadd.f32 %v950, 1.0
  %v952 = vrcp.pop %v951
  %v953 = vmul.f32 1.0, %v952
  %v954 = vtanh.pop %v947
  %v955 = vmul.f32 %v953, %v818
  %957 = vrot.lane.b32.xlu0 %v954, 64
  %v958 = vpop.permute.xlu0 %957
  %v960 = vmul.f32 %v953, %v958
  %962 = vrot.lane.b32.xlu0 %v960, 32
  %v963 = vpop.permute.xlu0 %962
  %v965 = vadd.f32 %v955, %v963
  %v966 = vtanh.pop %v965
  %968 = vrot.lane.b32.xlu0 %v966, 64
  %v969 = vpop.permute.xlu0 %968
  %v971 = vmul.f32 %v953, %v969
  %v972 = vpack.c.bf16 %v971, %v971
  %974 = vrot.lane.b32.xlu0 %v972, 32
  %v975 = vpop.permute.xlu0 %974
  %v977 = vsel %vm83, %v975, 0
  %979 = vmatprep.subr.bf16.mxu0 %v216
  %980 = vmatpush1.bf16.msra.mxu0 %v215
  %981 = vmatprep.subr.bf16.mxu0 %v218
  %982 = vmatpush1.bf16.msra.mxu0 %v217
  %983 = vmatprep.subr.bf16.mxu0 0
  %984 = vmatpush1.bf16.msra.mxu0 0
  %985 = vmatprep.subr.bf16.mxu0 0
  %986 = vmatpush1.bf16.msra.mxu0 0
  %987 = vmatprep.subr.bf16.mxu0 0
  %988 = vmatpush1.bf16.msra.mxu0 0
  %989 = vmatprep.subr.bf16.mxu0 0
  %990 = vmatpush1.bf16.msra.mxu0 0
  %991 = vmatprep.subr.bf16.mxu0 0
  %992 = vmatpush1.bf16.msra.mxu0 0
  %993 = vmatprep.subr.bf16.mxu0 0
  %994 = vmatpush1.bf16.msra.mxu0 0
  %995 = vmatprep.subr.bf16.mxu0 0
  %996 = vmatpush1.bf16.msra.mxu0 0
  %997 = vmatprep.subr.bf16.mxu0 0
  %998 = vmatpush1.bf16.msra.mxu0 0
  %999 = vmatprep.subr.bf16.mxu0 0
  %1000 = vmatpush1.bf16.msra.mxu0 0
  %1001 = vmatprep.subr.bf16.mxu0 0
  %1002 = vmatpush1.bf16.msra.mxu0 0
  %1003 = vmatprep.subr.bf16.mxu0 0
  %1004 = vmatpush1.bf16.msra.mxu0 0
  %1005 = vmatprep.subr.bf16.mxu0 0
  %1006 = vmatpush1.bf16.msra.mxu0 0
  %1007 = vmatprep.subr.bf16.mxu0 0
  %1008 = vmatpush1.bf16.msra.mxu0 0
  %1009 = vmatprep.subr.bf16.mxu0 0
  %1010 = vmatpush1.bf16.msra.mxu0 0
  %1011 = vmatprep.mubr.bf16.mxu0 0
  %1012 = vmatmul.mubr.bf16.gmra.mrb[0].mxu0 %v977
  %v1013 = vpop.f32.mrb[0].mxu0
  %v1014 = vadd.f32 0.0, %v1013
  %v1015 = vpop.f32.mrb[0].mxu0
  %v1016 = vadd.f32 0.0, %v1015
  %v1017 = vpop.f32.mrb[0].mxu0
  %v1018 = vpop.f32.mrb[0].mxu0
  %1019 = vdwg.mxu0
  %v1020 = vpack.c.bf16 %v945, %v945
  %1022 = vrot.lane.b32.xlu0 %v1020, 32
  %v1023 = vpop.permute.xlu0 %1022
  %v1025 = vsel %vm83, %v1023, 0
  %1027 = vmatprep.subr.bf16.mxu0 0
  %1028 = vmatpush1.bf16.msra.mxu0 %v279
  %1029 = vmatprep.subr.bf16.mxu0 0
  %1030 = vmatpush1.bf16.msra.mxu0 %v280
  %1031 = vmatprep.subr.bf16.mxu0 0
  %1032 = vmatpush1.bf16.msra.mxu0 0
  %1033 = vmatprep.subr.bf16.mxu0 0
  %1034 = vmatpush1.bf16.msra.mxu0 0
  %1035 = vmatprep.subr.bf16.mxu0 0
  %1036 = vmatpush1.bf16.msra.mxu0 0
  %1037 = vmatprep.subr.bf16.mxu0 0
  %1038 = vmatpush1.bf16.msra.mxu0 0
  %1039 = vmatprep.subr.bf16.mxu0 0
  %1040 = vmatpush1.bf16.msra.mxu0 0
  %1041 = vmatprep.subr.bf16.mxu0 0
  %1042 = vmatpush1.bf16.msra.mxu0 0
  %1043 = vmatprep.subr.bf16.mxu0 0
  %1044 = vmatpush1.bf16.msra.mxu0 0
  %1045 = vmatprep.subr.bf16.mxu0 0
  %1046 = vmatpush1.bf16.msra.mxu0 0
  %1047 = vmatprep.subr.bf16.mxu0 0
  %1048 = vmatpush1.bf16.msra.mxu0 0
  %1049 = vmatprep.subr.bf16.mxu0 0
  %1050 = vmatpush1.bf16.msra.mxu0 0
  %1051 = vmatprep.subr.bf16.mxu0 0
  %1052 = vmatpush1.bf16.msra.mxu0 0
  %1053 = vmatprep.subr.bf16.mxu0 0
  %1054 = vmatpush1.bf16.msra.mxu0 0
  %1055 = vmatprep.subr.bf16.mxu0 0
  %1056 = vmatpush1.bf16.msra.mxu0 0
  %1057 = vmatprep.subr.bf16.mxu0 0
  %1058 = vmatpush1.bf16.msra.mxu0 0
  %1059 = vmatprep.mubr.bf16.mxu0 0
  %1060 = vmatmul.mubr.bf16.gmra.mrb[0].mxu0 %v1025
  %v1061 = vpop.f32.mrb[0].mxu0
  %v1062 = vadd.f32 0.0, %v1061
  %v1063 = vpop.f32.mrb[0].mxu0
  %v1064 = vpop.f32.mrb[0].mxu0
  %v1065 = vpop.f32.mrb[0].mxu0
  %1066 = vdwg.mxu0
  %v1067 = vadd.f32 %v1016, %v1062
  %v1068 = vadd.f32 %v1067, %v331
  %v1069 = vxor.u32 %v1068, 2147483648
  %v1070 = vmul.f32 %v1069, 1.442695
  %v1071 = vpow.pop %v1070
  %v1072 = vadd.f32 %v1071, 1.0
  %v1073 = vrcp.pop %v1072
  %v1074 = vmul.f32 1.0, %v1073
  %v1075 = vtanh.pop %v1068
  %v1076 = vmul.f32 %v1074, %v939
  %1078 = vrot.lane.b32.xlu0 %v1075, 64
  %v1079 = vpop.permute.xlu0 %1078
  %v1081 = vmul.f32 %v1074, %v1079
  %1083 = vrot.lane.b32.xlu0 %v1081, 32
  %v1084 = vpop.permute.xlu0 %1083
  %v1086 = vadd.f32 %v1076, %v1084
  %v1087 = vtanh.pop %v1086
  %1089 = vrot.lane.b32.xlu0 %v1087, 64
  %v1090 = vpop.permute.xlu0 %1089
  %v1092 = vmul.f32 %v1074, %v1090
  %v1093 = vld [vmem:[#allocation2 + $0x30] sm:$0xff]
  %v1094 = vadd.f32 %v1093, %v1014
  %v1095 = vxor.u32 %v1094, 2147483648
  %v1096 = vmul.f32 %v1095, 1.442695
  %v1097 = vpow.pop %v1096
  %v1098 = vadd.f32 %v1097, 1.0
  %v1099 = vrcp.pop %v1098
  %v1100 = vmul.f32 1.0, %v1099
  %v1101 = vtanh.pop %v1094
  %v1102 = vmul.f32 %v1100, %v965
  %1104 = vrot.lane.b32.xlu0 %v1101, 64
  %v1105 = vpop.permute.xlu0 %1104
  %v1107 = vmul.f32 %v1100, %v1105
  %1109 = vrot.lane.b32.xlu0 %v1107, 32
  %v1110 = vpop.permute.xlu0 %1109
  %v1112 = vadd.f32 %v1102, %v1110
  %v1113 = vtanh.pop %v1112
  %1115 = vrot.lane.b32.xlu0 %v1113, 64
  %v1116 = vpop.permute.xlu0 %1115
  %v1118 = vmul.f32 %v1100, %v1116
  %v1119 = vpack.c.bf16 %v1118, %v1118
  %1121 = vrot.lane.b32.xlu0 %v1119, 32
  %v1122 = vpop.permute.xlu0 %1121
  %v1124 = vsel %vm83, %v1122, 0
  %1126 = vmatprep.subr.bf16.mxu0 %v216
  %1127 = vmatpush1.bf16.msra.mxu0 %v215
  %1128 = vmatprep.subr.bf16.mxu0 %v218
  %1129 = vmatpush1.bf16.msra.mxu0 %v217
  %1130 = vmatprep.subr.bf16.mxu0 0
  %1131 = vmatpush1.bf16.msra.mxu0 0
  %1132 = vmatprep.subr.bf16.mxu0 0
  %1133 = vmatpush1.bf16.msra.mxu0 0
  %1134 = vmatprep.subr.bf16.mxu0 0
  %1135 = vmatpush1.bf16.msra.mxu0 0
  %1136 = vmatprep.subr.bf16.mxu0 0
  %1137 = vmatpush1.bf16.msra.mxu0 0
  %1138 = vmatprep.subr.bf16.mxu0 0
  %1139 = vmatpush1.bf16.msra.mxu0 0
  %1140 = vmatprep.subr.bf16.mxu0 0
  %1141 = vmatpush1.bf16.msra.mxu0 0
  %1142 = vmatprep.subr.bf16.mxu0 0
  %1143 = vmatpush1.bf16.msra.mxu0 0
  %1144 = vmatprep.subr.bf16.mxu0 0
  %1145 = vmatpush1.bf16.msra.mxu0 0
  %1146 = vmatprep.subr.bf16.mxu0 0
  %1147 = vmatpush1.bf16.msra.mxu0 0
  %1148 = vmatprep.subr.bf16.mxu0 0
  %1149 = vmatpush1.bf16.msra.mxu0 0
  %1150 = vmatprep.subr.bf16.mxu0 0
  %1151 = vmatpush1.bf16.msra.mxu0 0
  %1152 = vmatprep.subr.bf16.mxu0 0
  %1153 = vmatpush1.bf16.msra.mxu0 0
  %1154 = vmatprep.subr.bf16.mxu0 0
  %1155 = vmatpush1.bf16.msra.mxu0 0
  %1156 = vmatprep.subr.bf16.mxu0 0
  %1157 = vmatpush1.bf16.msra.mxu0 0
  %1158 = vmatprep.mubr.bf16.mxu0 0
  %1159 = vmatmul.mubr.bf16.gmra.mrb[0].mxu0 %v1124
  %v1160 = vpop.f32.mrb[0].mxu0
  %v1161 = vadd.f32 0.0, %v1160
  %v1162 = vpop.f32.mrb[0].mxu0
  %v1163 = vadd.f32 0.0, %v1162
  %v1164 = vpop.f32.mrb[0].mxu0
  %v1165 = vpop.f32.mrb[0].mxu0
  %1166 = vdwg.mxu0
  %v1167 = vpack.c.bf16 %v1092, %v1092
  %1169 = vrot.lane.b32.xlu0 %v1167, 32
  %v1170 = vpop.permute.xlu0 %1169
  %v1172 = vsel %vm83, %v1170, 0
  %1174 = vmatprep.subr.bf16.mxu0 0
  %1175 = vmatpush1.bf16.msra.mxu0 %v279
  %1176 = vmatprep.subr.bf16.mxu0 0
  %1177 = vmatpush1.bf16.msra.mxu0 %v280
  %1178 = vmatprep.subr.bf16.mxu0 0
  %1179 = vmatpush1.bf16.msra.mxu0 0
  %1180 = vmatprep.subr.bf16.mxu0 0
  %1181 = vmatpush1.bf16.msra.mxu0 0
  %1182 = vmatprep.subr.bf16.mxu0 0
  %1183 = vmatpush1.bf16.msra.mxu0 0
  %1184 = vmatprep.subr.bf16.mxu0 0
  %1185 = vmatpush1.bf16.msra.mxu0 0
  %1186 = vmatprep.subr.bf16.mxu0 0
  %1187 = vmatpush1.bf16.msra.mxu0 0
  %1188 = vmatprep.subr.bf16.mxu0 0
  %1189 = vmatpush1.bf16.msra.mxu0 0
  %1190 = vmatprep.subr.bf16.mxu0 0
  %1191 = vmatpush1.bf16.msra.mxu0 0
  %1192 = vmatprep.subr.bf16.mxu0 0
  %1193 = vmatpush1.bf16.msra.mxu0 0
  %1194 = vmatprep.subr.bf16.mxu0 0
  %1195 = vmatpush1.bf16.msra.mxu0 0
  %1196 = vmatprep.subr.bf16.mxu0 0
  %1197 = vmatpush1.bf16.msra.mxu0 0
  %1198 = vmatprep.subr.bf16.mxu0 0
  %1199 = vmatpush1.bf16.msra.mxu0 0
  %1200 = vmatprep.subr.bf16.mxu0 0
  %1201 = vmatpush1.bf16.msra.mxu0 0
  %1202 = vmatprep.subr.bf16.mxu0 0
  %1203 = vmatpush1.bf16.msra.mxu0 0
  %1204 = vmatprep.subr.bf16.mxu0 0
  %1205 = vmatpush1.bf16.msra.mxu0 0
  %1206 = vmatprep.mubr.bf16.mxu0 0
  %1207 = vmatmul.mubr.bf16.gmra.mrb[0].mxu0 %v1172
  %v1208 = vpop.f32.mrb[0].mxu0
  %v1209 = vadd.f32 0.0, %v1208
  %v1210 = vpop.f32.mrb[0].mxu0
  %v1211 = vpop.f32.mrb[0].mxu0
  %v1212 = vpop.f32.mrb[0].mxu0
  %1213 = vdwg.mxu0
  %v1214 = vadd.f32 %v1163, %v1209
  %v1215 = vadd.f32 %v1214, %v331
  %v1216 = vxor.u32 %v1215, 2147483648
  %v1217 = vmul.f32 %v1216, 1.442695
  %v1218 = vpow.pop %v1217
  %v1219 = vadd.f32 %v1218, 1.0
  %v1220 = vrcp.pop %v1219
  %v1221 = vmul.f32 1.0, %v1220
  %v1222 = vtanh.pop %v1215
  %v1223 = vmul.f32 %v1221, %v1086
  %1225 = vrot.lane.b32.xlu0 %v1222, 64
  %v1226 = vpop.permute.xlu0 %1225
  %v1228 = vmul.f32 %v1221, %v1226
  %1230 = vrot.lane.b32.xlu0 %v1228, 32
  %v1231 = vpop.permute.xlu0 %1230
  %v1233 = vadd.f32 %v1223, %v1231
  %v1234 = vtanh.pop %v1233
  %1236 = vrot.lane.b32.xlu0 %v1234, 64
  %v1237 = vpop.permute.xlu0 %1236
  %v1239 = vmul.f32 %v1221, %v1237
  %v1240 = vld [vmem:[#allocation2 + $0x38] sm:$0xff]
  %v1241 = vadd.f32 %v1240, %v1161
  %v1242 = vxor.u32 %v1241, 2147483648
  %v1243 = vmul.f32 %v1242, 1.442695
  %v1244 = vpow.pop %v1243
  %v1245 = vadd.f32 %v1244, 1.0
  %v1246 = vrcp.pop %v1245
  %v1247 = vmul.f32 1.0, %v1246
  %v1248 = vtanh.pop %v1241
  %v1249 = vmul.f32 %v1247, %v1112
  %1251 = vrot.lane.b32.xlu0 %v1248, 64
  %v1252 = vpop.permute.xlu0 %1251
  %v1254 = vmul.f32 %v1247, %v1252
  %1256 = vrot.lane.b32.xlu0 %v1254, 32
  %v1257 = vpop.permute.xlu0 %1256
  %v1259 = vadd.f32 %v1249, %v1257
  %v1260 = vtanh.pop %v1259
  %1262 = vrot.lane.b32.xlu0 %v1260, 64
  %v1263 = vpop.permute.xlu0 %1262
  %v1265 = vmul.f32 %v1247, %v1263
  %v1266 = vpack.c.bf16 %v1265, %v1265
  %1268 = vrot.lane.b32.xlu0 %v1266, 32
  %v1269 = vpop.permute.xlu0 %1268
  %v1271 = vsel %vm83, %v1269, 0
  %1273 = vmatprep.subr.bf16.mxu0 %v216
  %1274 = vmatpush1.bf16.msra.mxu0 %v215
  %1275 = vmatprep.subr.bf16.mxu0 %v218
  %1276 = vmatpush1.bf16.msra.mxu0 %v217
  %1277 = vmatprep.subr.bf16.mxu0 0
  %1278 = vmatpush1.bf16.msra.mxu0 0
  %1279 = vmatprep.subr.bf16.mxu0 0
  %1280 = vmatpush1.bf16.msra.mxu0 0
  %1281 = vmatprep.subr.bf16.mxu0 0
  %1282 = vmatpush1.bf16.msra.mxu0 0
  %1283 = vmatprep.subr.bf16.mxu0 0
  %1284 = vmatpush1.bf16.msra.mxu0 0
  %1285 = vmatprep.subr.bf16.mxu0 0
  %1286 = vmatpush1.bf16.msra.mxu0 0
  %1287 = vmatprep.subr.bf16.mxu0 0
  %1288 = vmatpush1.bf16.msra.mxu0 0
  %1289 = vmatprep.subr.bf16.mxu0 0
  %1290 = vmatpush1.bf16.msra.mxu0 0
  %1291 = vmatprep.subr.bf16.mxu0 0
  %1292 = vmatpush1.bf16.msra.mxu0 0
  %1293 = vmatprep.subr.bf16.mxu0 0
  %1294 = vmatpush1.bf16.msra.mxu0 0
  %1295 = vmatprep.subr.bf16.mxu0 0
  %1296 = vmatpush1.bf16.msra.mxu0 0
  %1297 = vmatprep.subr.bf16.mxu0 0
  %1298 = vmatpush1.bf16.msra.mxu0 0
  %1299 = vmatprep.subr.bf16.mxu0 0
  %1300 = vmatpush1.bf16.msra.mxu0 0
  %1301 = vmatprep.subr.bf16.mxu0 0
  %1302 = vmatpush1.bf16.msra.mxu0 0
  %1303 = vmatprep.subr.bf16.mxu0 0
  %1304 = vmatpush1.bf16.msra.mxu0 0
  %1305 = vmatprep.mubr.bf16.mxu0 0
  %1306 = vmatmul.mubr.bf16.gmra.mrb[0].mxu0 %v1271
  %v1307 = vpop.f32.mrb[0].mxu0
  %v1308 = vpop.f32.mrb[0].mxu0
  %v1309 = vadd.f32 0.0, %v1308
  %v1310 = vpop.f32.mrb[0].mxu0
  %v1311 = vpop.f32.mrb[0].mxu0
  %1312 = vdwg.mxu0
  %v1313 = vpack.c.bf16 %v1239, %v1239
  %1315 = vrot.lane.b32.xlu0 %v1313, 32
  %v1316 = vpop.permute.xlu0 %1315
  %v1318 = vsel %vm83, %v1316, 0
  %1320 = vmatprep.subr.bf16.mxu0 0
  %1321 = vmatpush1.bf16.msra.mxu0 %v279
  %1322 = vmatprep.subr.bf16.mxu0 0
  %1323 = vmatpush1.bf16.msra.mxu0 %v280
  %1324 = vmatprep.subr.bf16.mxu0 0
  %1325 = vmatpush1.bf16.msra.mxu0 0
  %1326 = vmatprep.subr.bf16.mxu0 0
  %1327 = vmatpush1.bf16.msra.mxu0 0
  %1328 = vmatprep.subr.bf16.mxu0 0
  %1329 = vmatpush1.bf16.msra.mxu0 0
  %1330 = vmatprep.subr.bf16.mxu0 0
  %1331 = vmatpush1.bf16.msra.mxu0 0
  %1332 = vmatprep.subr.bf16.mxu0 0
  %1333 = vmatpush1.bf16.msra.mxu0 0
  %1334 = vmatprep.subr.bf16.mxu0 0
  %1335 = vmatpush1.bf16.msra.mxu0 0
  %1336 = vmatprep.subr.bf16.mxu0 0
  %1337 = vmatpush1.bf16.msra.mxu0 0
  %1338 = vmatprep.subr.bf16.mxu0 0
  %1339 = vmatpush1.bf16.msra.mxu0 0
  %1340 = vmatprep.subr.bf16.mxu0 0
  %1341 = vmatpush1.bf16.msra.mxu0 0
  %1342 = vmatprep.subr.bf16.mxu0 0
  %1343 = vmatpush1.bf16.msra.mxu0 0
  %1344 = vmatprep.subr.bf16.mxu0 0
  %1345 = vmatpush1.bf16.msra.mxu0 0
  %1346 = vmatprep.subr.bf16.mxu0 0
  %1347 = vmatpush1.bf16.msra.mxu0 0
  %1348 = vmatprep.subr.bf16.mxu0 0
  %1349 = vmatpush1.bf16.msra.mxu0 0
  %1350 = vmatprep.subr.bf16.mxu0 0
  %1351 = vmatpush1.bf16.msra.mxu0 0
  %1352 = vmatprep.mubr.bf16.mxu0 0
  %1353 = vmatmul.mubr.bf16.gmra.mrb[0].mxu0 %v1318
  %v1354 = vpop.f32.mrb[0].mxu0
  %v1355 = vadd.f32 0.0, %v1354
  %v1356 = vpop.f32.mrb[0].mxu0
  %v1357 = vpop.f32.mrb[0].mxu0
  %v1358 = vpop.f32.mrb[0].mxu0
  %1359 = vdwg.mxu0
  %v1360 = vadd.f32 %v1309, %v1355
  %v1361 = vadd.f32 %v1360, %v331
  %v1362 = vxor.u32 %v1361, 2147483648
  %v1363 = vmul.f32 %v1362, 1.442695
  %v1364 = vpow.pop %v1363
  %v1365 = vadd.f32 %v1364, 1.0
  %v1366 = vrcp.pop %v1365
  %v1367 = vmul.f32 1.0, %v1366
  %v1368 = vtanh.pop %v1361
  %v1369 = vmul.f32 %v1367, %v1233
  %1371 = vrot.lane.b32.xlu0 %v1368, 64
  %v1372 = vpop.permute.xlu0 %1371
  %v1374 = vmul.f32 %v1367, %v1372
  %1376 = vrot.lane.b32.xlu0 %v1374, 32
  %v1377 = vpop.permute.xlu0 %1376
  %v1379 = vadd.f32 %v1369, %v1377
  %v1380 = vtanh.pop %v1379
  %1382 = vrot.lane.b32.xlu0 %v1380, 64
  %v1383 = vpop.permute.xlu0 %1382
  %v1385 = vmul.f32 %v1367, %v1383
  %v1386 = vld [vmem:[%s6] sm:$0x1]
  %v1388 = vlaneseq
  %v1389 = vshrl.u32 %v1388, 7
  %v1390 = vsub.s32 0, %v1389
  %v1391 = vrot.slane %v1386, %v1390
  %1392 = vrot.lane.b32.xlu0 %v1391, 96
  %v1393 = vpop.permute.xlu0 %1392
  %v1395 = vmul.f32 %v1385, %v1393
  %1397 = vrot.lane.b32.xlu0 %v1395, 32
  %v1398 = vpop.permute.xlu0 %1397
  %v1400 = vsel %vm83, %v1398, 0.0
  %1401 = vadd.xlane.f32.xlu0 %v1400
  %v1402 = vpop.xlane.xlu0 %1401
  %v1403 = vld [vmem:[#allocation3] sm:$0x1]
  %v1405 = vlaneseq
  %v1406 = vshrl.u32 %v1405, 7
  %v1407 = vsub.s32 0, %v1406
  %v1408 = vrot.slane %v1403, %v1407
  %v1410 = vadd.f32 %v1402, %v1408
  %v1411 = vxor.u32 %v1410, 2147483648
  %v1412 = vmul.f32 %v1411, 1.442695
  %v1413 = vpow.pop %v1412
  %v1414 = vadd.f32 %v1413, 1.0
  %v1415 = vrcp.pop %v1414
  %v1416 = vmul.f32 1.0, %v1415
  %vm1417 = vcmask 7168
  %1418 = vst.msk [vmem:[%s8] sm:$0xff] %vm1417, %v1416
  // Predicated region
  $region34: #{sentiment_net_forward.1} parent=0 // pred_check
    _
  $region35: #{sentiment_net_forward.1} parent=0 // pred_check_branch
    %1420 = sbr.rel (0) target = $region37
  $region36: #{sentiment_net_forward.1} parent=0 // pred_region
    _
  $region37: #{sentiment_net_forward.1} parent=0 // pred_fallthru
    _
  // Predicated region
  $region38: #{sentiment_net_forward.1} parent=0 // pred_check
    _
  $region39: #{sentiment_net_forward.1} parent=0 // pred_check_branch
    %1422 = sbr.rel (0) target = $region41
  $region40: #{sentiment_net_forward.1} parent=0 // pred_region
    _
  $region41: #{sentiment_net_forward.1} parent=0 // pred_fallthru
    _

</llo_original>
